<compile_context>
chip_gen: v7x
topology: tpu7x:2x2x1
jax: 0.10.0
libtpu: 0.0.40
codegen_flags: <defaults>
</compile_context>

<pallas_src>
import jax
import jax.numpy as jnp
from jax.experimental import pallas as pl
from jax.experimental.pallas import tpu as pltpu


# ----------------------------------------------------------------------------
# Pallas kernel: serial LSTM recurrence (input projection pre-hoisted) + Linear
# ----------------------------------------------------------------------------
def lstm_recurrence_kernel(xg_ref, w_hh_ref, fc_w_ref, fc_b_ref, logits_ref):
    T = xg_ref.shape[0]
    H = w_hh_ref.shape[0]

    def cell(gates, c_prev):
        # gates: (tile_b, 4H) f32 in PyTorch order [i, f, g, o]
        if_g = jax.nn.sigmoid(gates[:, : 2 * H])        # fused i|f sigmoid (one EUP pass)
        g_g = jnp.tanh(gates[:, 2 * H: 3 * H])
        o_g = jax.nn.sigmoid(gates[:, 3 * H:])
        c_new = if_g[:, H:] * c_prev + if_g[:, :H] * g_g
        h_new = o_g * jnp.tanh(c_new)
        return h_new, c_new

    # t = 0: h_0 = c_0 = 0, so the h @ W_hh term vanishes.
    zeros_c = jnp.zeros((xg_ref.shape[1], H), jnp.float32)
    h, c = cell(xg_ref[0].astype(jnp.float32), zeros_c)

    # Static unroll: T is compile-time known and small; h/c live in vregs.
    # W_hh is re-read from the (VMEM-resident) ref each step so no 256 KiB value
    # is live across the whole unroll (keeps the vreg file for h/c/gates).
    # TODO(synk): stage W_hh once in the MXU weight registers via
    # pltpu.matmul_push_rhs / matmul_acc_lhs / matmul_pop and reuse across all T.
    for t in range(1, T):
        hh = jnp.dot(h.astype(w_hh_ref.dtype), w_hh_ref[...],
                     preferred_element_type=jnp.float32)
        gates = xg_ref[t].astype(jnp.float32) + hh
        h, c = cell(gates, c)

    # logits = h_T @ fc_w + fc_b   (lane-dense C_pad-wide unmasked store)
    logits_ref[...] = (
        jnp.dot(h.astype(fc_w_ref.dtype), fc_w_ref[...],
                preferred_element_type=jnp.float32)
        + fc_b_ref[...]
    ).astype(logits_ref.dtype)


# ----------------------------------------------------------------------------
# Tiling / hardware helpers
# ----------------------------------------------------------------------------
def _round_up(x, m):
    return -(-x // m) * m


def _tpu_vmem_capacity_bytes():
    try:
        info = pltpu.get_tpu_info()
        for name in ("vmem_capacity_bytes", "vmem_size_bytes"):
            v = getattr(info, name, None)
            if isinstance(v, int) and v > 0:
                return v
    except Exception:
        pass
    return 64 << 20   # conservative default (v7x per-TensorCore VMEM)


def _num_tensorcores():
    try:
        info = pltpu.get_tpu_info()
        for name in ("num_cores", "tensor_cores_per_chip", "num_tensor_cores"):
            v = getattr(info, name, None)
            if isinstance(v, int) and v > 0:
                return v
    except Exception:
        pass
    try:
        v = getattr(jax.devices()[0], "num_cores", None)
        if isinstance(v, int) and v > 0:
            return v
    except Exception:
        pass
    return 1


def _choose_tiling(B, T, H_pad, C_pad, compute_itemsize, min_tile):
    """MXU-shaped batch tile that fits the generation-aware VMEM budget."""
    vmem_cap = _tpu_vmem_capacity_bytes()
    n_cores = _num_tensorcores()
    vmem_budget = (vmem_cap * 3) // 4            # leave headroom for internal scratch

    B_rnd = max(min_tile, _round_up(B, min_tile))

    # Double-buffered VMEM usage for a candidate batch tile.
    fixed = 2 * (H_pad * 4 * H_pad * compute_itemsize      # W_hh
                 + H_pad * C_pad * compute_itemsize        # fc_w
                 + C_pad * 4)                              # fc_b (f32)

    def fits(tb):
        xg = 2 * T * tb * 4 * H_pad * compute_itemsize     # x_gates tile, 2 buffers
        out = 2 * tb * C_pad * 4                           # logits tile, 2 buffers
        return fixed + xg + out + (2 << 20) <= vmem_budget

    tile_b = min_tile
    for tb in (256, 128, 64, 32, 16, 8):
        if tb < min_tile or not fits(tb):
            continue
        # Only fall back to small tiles when the batch itself is tiny: reject
        # tiles that would more than double the (rounded) batch.
        if tb > min_tile and _round_up(B_rnd, tb) >= 2 * B_rnd:
            continue
        tile_b = tb
        break

    # v7x: make sure the "parallel" batch axis has >= n_cores tiles so both
    # TensorCores get work (no-op on single-core v5e / v6e).
    if n_cores > 1 and B_rnd >= 2 * min_tile:
        while tile_b > min_tile and _round_up(B_rnd, tile_b) // tile_b < n_cores:
            tile_b //= 2

    B_pad = _round_up(B_rnd, tile_b)
    return tile_b, B_pad, int(vmem_budget)


def _pad_per_gate(m, H, H_pad):
    """Zero-pad each of the 4 gate segments of the last axis from H to H_pad."""
    if H_pad == H:
        return m
    parts = jnp.split(m, 4, axis=-1)
    pad = [(0, 0)] * (m.ndim - 1) + [(0, H_pad - H)]
    return jnp.concatenate([jnp.pad(p, pad) for p in parts], axis=-1)


# ----------------------------------------------------------------------------
# Forward wrapper
# ----------------------------------------------------------------------------
def cbow_classifier_forward(input_ids, params, *, compute_dtype=jnp.bfloat16):
    """Embedding gather + hoisted input projection in XLA, LSTM recurrence in Pallas."""
    emb_tbl = params["embedding"]
    w_ih, w_hh, b = params["w_ih"], params["w_hh"], params["b"]
    fc_w, fc_b = params["fc_w"], params["fc_b"]

    B, T = input_ids.shape
    H = w_hh.shape[0]
    C = fc_w.shape[1]

    # Lane padding: H to 128 (keeps the [i|f]/g/o slices on vreg-lane boundaries),
    # classes to 128 (lane-dense unmasked output store); batch rounded to the
    # packing height of the compute dtype.
    H_pad = max(128, _round_up(H, 128))
    C_pad = max(128, _round_up(C, 128))
    compute_itemsize = jnp.dtype(compute_dtype).itemsize
    min_tile = 16 if compute_itemsize < 4 else 8

    tile_b, B_pad, vmem_budget = _choose_tiling(
        B, T, H_pad, C_pad, compute_itemsize, min_tile)

    # Per-gate zero-padding keeps the padded hidden units identically zero at
    # every timestep, so they never perturb the real lanes.
    w_ih_p = _pad_per_gate(w_ih, H, H_pad)                        # (E, 4*H_pad)
    b_p = _pad_per_gate(b, H, H_pad)                              # (1, 4*H_pad)
    w_hh_p = _pad_per_gate(jnp.pad(w_hh, ((0, H_pad - H), (0, 0))), H, H_pad)
    fc_w_p = jnp.pad(fc_w, ((0, H_pad - H), (0, C_pad - C)))      # (H_pad, C_pad)
    fc_b_p = jnp.pad(fc_b, ((0, 0), (0, C_pad - C)))              # (1, C_pad)

    # Embedding gather (data-dependent gather left to XLA).
    emb = jnp.take(emb_tbl, input_ids, axis=0).astype(jnp.float32)   # (B, T, E)
    if B_pad != B:
        emb = jnp.pad(emb, ((0, B_pad - B), (0, 0), (0, 0)))

    # Hoisted input projection, emitted directly time-major (no transpose pass).
    x_gates = jnp.einsum("bte,eg->tbg", emb, w_ih_p) + b_p            # (T, B_pad, 4*H_pad)
    x_gates = x_gates.astype(compute_dtype)
    w_hh_c = w_hh_p.astype(compute_dtype)
    fc_w_c = fc_w_p.astype(compute_dtype)

    grid = (B_pad // tile_b,)

    # Advisory cost so XLA schedules the gather / projection around the call.
    flops = int(B_pad * (T * 2 * H_pad * 4 * H_pad + 2 * H_pad * C_pad))
    transcendentals = int(B_pad * T * 5 * H_pad)
    bytes_accessed = int(
        x_gates.size * compute_itemsize
        + grid[0] * (w_hh_c.size + fc_w_c.size) * compute_itemsize
        + grid[0] * fc_b_p.size * 4
        + B_pad * C_pad * 4)

    logits_pad = pl.pallas_call(
        lstm_recurrence_kernel,
        out_shape=jax.ShapeDtypeStruct((B_pad, C_pad), jnp.float32),
        grid=grid,
        in_specs=[
            pl.BlockSpec((T, tile_b, 4 * H_pad), lambda i: (0, i, 0)),   # x_gates tile
            pl.BlockSpec((H_pad, 4 * H_pad), lambda i: (0, 0)),          # W_hh (resident)
            pl.BlockSpec((H_pad, C_pad), lambda i: (0, 0)),              # fc_w
            pl.BlockSpec((1, C_pad), lambda i: (0, 0)),                  # fc_b
        ],
        out_specs=pl.BlockSpec((tile_b, C_pad), lambda i: (i, 0)),
        compiler_params=pltpu.CompilerParams(
            dimension_semantics=("parallel",),
            vmem_limit_bytes=vmem_budget,
        ),
        cost_estimate=pl.CostEstimate(
            flops=flops,
            transcendentals=transcendentals,
            bytes_accessed=bytes_accessed),
    )(x_gates, w_hh_c, fc_w_c, fc_b_p)

    # TODO(synk): for long sequences, stream x_gates over a T-chunk grid axis
    # ("arbitrary", pipeline_mode=pl.Buffered(3)) with h/c carried in VMEM
    # scratch and the output written under pl.when on the last chunk, instead
    # of keeping the whole (T, tile_b, 4H) slab resident.

    # Padded batch rows / class lanes are garbage by construction: slice off.
    return logits_pad[:B, :C]


# ----------------------------------------------------------------------------
# Reference & params
# ----------------------------------------------------------------------------
def reference_forward(input_ids, params):
    """Pure-JAX reference mirroring torch.nn.LSTM + Linear semantics."""
    emb = jnp.take(params["embedding"], input_ids, axis=0)   # (B, T, E)
    B, T, _ = emb.shape
    H = params["w_hh"].shape[0]
    h = jnp.zeros((B, H), jnp.float32)
    c = jnp.zeros((B, H), jnp.float32)
    for t in range(T):
        g = emb[:, t, :] @ params["w_ih"] + h @ params["w_hh"] + params["b"]
        i = jax.nn.sigmoid(g[:, 0:H])
        f = jax.nn.sigmoid(g[:, H:2 * H])
        gg = jnp.tanh(g[:, 2 * H:3 * H])
        o = jax.nn.sigmoid(g[:, 3 * H:4 * H])
        c = f * c + i * gg
        h = o * jnp.tanh(c)
    return h @ params["fc_w"] + params["fc_b"]


def init_params(key, vocab_size, embed_dim, hidden_size, num_classes):
    ks = jax.random.split(key, 6)
    s = 0.1
    return {
        "embedding": s * jax.random.normal(ks[0], (vocab_size, embed_dim), jnp.float32),
        "w_ih": s * jax.random.normal(ks[1], (embed_dim, 4 * hidden_size), jnp.float32),
        "w_hh": s * jax.random.normal(ks[2], (hidden_size, 4 * hidden_size), jnp.float32),
        "b": s * jax.random.normal(ks[3], (1, 4 * hidden_size), jnp.float32),
        "fc_w": s * jax.random.normal(ks[4], (hidden_size, num_classes), jnp.float32),
        "fc_b": s * jax.random.normal(ks[5], (1, num_classes), jnp.float32),
    }


if __name__ == "__main__":
    B, T = 2, 8                 # batch, sequence length
    VOCAB, E = 50, 32           # vocab size, embedding dim
    H, C = 128, 4               # rnn_hidden_size (module default), num_classes

    key = jax.random.PRNGKey(0)
    pkey, dkey = jax.random.split(key)
    params = init_params(pkey, VOCAB, E, H, C)
    input_ids = jax.random.randint(dkey, (B, T), 0, VOCAB, dtype=jnp.int32)

    ref = reference_forward(input_ids, params)

    # Default path: bf16 MXU operands, f32 accumulation & gate math.
    logits = cbow_classifier_forward(input_ids, params)
    logits = jax.block_until_ready(logits)
    assert logits.shape == (B, C)
    assert jnp.allclose(logits, ref, atol=2e-2, rtol=2e-2), "bf16 path mismatch vs reference"

    # Full-f32 path (tight tolerance).
    logits_f32 = cbow_classifier_forward(input_ids, params, compute_dtype=jnp.float32)
    logits_f32 = jax.block_until_ready(logits_f32)
    assert jnp.allclose(logits_f32, ref, atol=1e-4, rtol=1e-4), "f32 path mismatch vs reference"

    print("KERNEL_OK")
</pallas_src>

<mosaic_0001>
module attributes {stable_mosaic.version = 11 : i64} {
  func.func @lstm_recurrence_kernel(%arg0: i32, %arg1: memref<8x16x512xbf16, #tpu.memory_space<vmem>>, %arg2: memref<128x512xbf16, #tpu.memory_space<vmem>>, %arg3: memref<128x128xbf16, #tpu.memory_space<vmem>>, %arg4: memref<1x128xf32, #tpu.memory_space<vmem>>, %arg5: memref<16x128xf32, #tpu.memory_space<vmem>>) attributes {dimension_semantics = [#tpu.dimension_semantics<parallel>], iteration_bounds = array<i64: 1>, scalar_prefetch = 0 : i64, scratch_operands = 0 : i64, tpu.core_type = #tpu.core_type<tc>, window_params = [{transform_indices = @transform_0, window_bounds = array<i64: 8, 16, 512>}, {pipeline_mode = #tpu.pipeline_mode<synchronous>, transform_indices = @transform_1, window_bounds = array<i64: 128, 512>}, {pipeline_mode = #tpu.pipeline_mode<synchronous>, transform_indices = @transform_2, window_bounds = array<i64: 128, 128>}, {pipeline_mode = #tpu.pipeline_mode<synchronous>, transform_indices = @transform_3, window_bounds = array<i64: 1, 128>}, {transform_indices = @transform_4, window_bounds = array<i64: 16, 128>}]} {
    %cst = arith.constant 0.000000e+00 : f32
    %0 = vector.broadcast %cst : f32 to vector<16x128xf32>
    %c0 = arith.constant 0 : index
    %c0_0 = arith.constant 0 : index
    %c0_1 = arith.constant 0 : index
    %1 = vector.load %arg1[%c0, %c0_0, %c0_1] : memref<8x16x512xbf16, #tpu.memory_space<vmem>>, vector<1x16x512xbf16>
    %2 = vector.shape_cast %1 : vector<1x16x512xbf16> to vector<16x512xbf16>
    %3 = arith.extf %2 : vector<16x512xbf16> to vector<16x512xf32>
    %4 = vector.extract_strided_slice %3 {offsets = [0, 0], sizes = [16, 256], strides = [1, 1]} : vector<16x512xf32> to vector<16x256xf32>
    %5 = arith.negf %4 : vector<16x256xf32>
    %6 = math.exp %5 : vector<16x256xf32>
    %cst_2 = arith.constant 1.000000e+00 : f32
    %7 = vector.broadcast %cst_2 : f32 to vector<16x256xf32>
    %8 = arith.addf %7, %6 : vector<16x256xf32>
    %9 = arith.divf %7, %8 : vector<16x256xf32>
    %10 = vector.extract_strided_slice %3 {offsets = [0, 256], sizes = [16, 128], strides = [1, 1]} : vector<16x512xf32> to vector<16x128xf32>
    %11 = math.tanh %10 : vector<16x128xf32>
    %12 = vector.extract_strided_slice %3 {offsets = [0, 384], sizes = [16, 128], strides = [1, 1]} : vector<16x512xf32> to vector<16x128xf32>
    %13 = arith.negf %12 : vector<16x128xf32>
    %14 = math.exp %13 : vector<16x128xf32>
    %cst_3 = arith.constant 1.000000e+00 : f32
    %15 = vector.broadcast %cst_3 : f32 to vector<16x128xf32>
    %16 = arith.addf %15, %14 : vector<16x128xf32>
    %17 = arith.divf %15, %16 : vector<16x128xf32>
    %18 = vector.extract_strided_slice %9 {offsets = [0, 128], sizes = [16, 128], strides = [1, 1]} : vector<16x256xf32> to vector<16x128xf32>
    %19 = arith.mulf %18, %0 : vector<16x128xf32>
    %20 = vector.extract_strided_slice %9 {offsets = [0, 0], sizes = [16, 128], strides = [1, 1]} : vector<16x256xf32> to vector<16x128xf32>
    %21 = arith.mulf %20, %11 : vector<16x128xf32>
    %22 = arith.addf %19, %21 : vector<16x128xf32>
    %23 = math.tanh %22 : vector<16x128xf32>
    %24 = arith.mulf %17, %23 : vector<16x128xf32>
    %25 = arith.truncf %24 : vector<16x128xf32> to vector<16x128xbf16>
    %c0_4 = arith.constant 0 : index
    %c0_5 = arith.constant 0 : index
    %26 = vector.load %arg2[%c0_4, %c0_5] : memref<128x512xbf16, #tpu.memory_space<vmem>>, vector<128x512xbf16>
    %cst_6 = arith.constant dense<0.000000e+00> : vector<16x512xf32>
    %27 = tpu.matmul %25, %26, %cst_6 {dimension_numbers = #tpu.dot_dimension_numbers<[1], [0], [0], [1], [0, 0, 1, 1], [], []>} : vector<16x128xbf16>, vector<128x512xbf16>, vector<16x512xf32> -> vector<16x512xf32>
    %c1 = arith.constant 1 : index
    %c0_7 = arith.constant 0 : index
    %c0_8 = arith.constant 0 : index
    %28 = vector.load %arg1[%c1, %c0_7, %c0_8] : memref<8x16x512xbf16, #tpu.memory_space<vmem>>, vector<1x16x512xbf16>
    %29 = vector.shape_cast %28 : vector<1x16x512xbf16> to vector<16x512xbf16>
    %30 = arith.extf %29 : vector<16x512xbf16> to vector<16x512xf32>
    %31 = arith.addf %30, %27 : vector<16x512xf32>
    %32 = vector.extract_strided_slice %31 {offsets = [0, 0], sizes = [16, 256], strides = [1, 1]} : vector<16x512xf32> to vector<16x256xf32>
    %33 = arith.negf %32 : vector<16x256xf32>
    %34 = math.exp %33 : vector<16x256xf32>
    %cst_9 = arith.constant 1.000000e+00 : f32
    %35 = vector.broadcast %cst_9 : f32 to vector<16x256xf32>
    %36 = arith.addf %35, %34 : vector<16x256xf32>
    %37 = arith.divf %35, %36 : vector<16x256xf32>
    %38 = vector.extract_strided_slice %31 {offsets = [0, 256], sizes = [16, 128], strides = [1, 1]} : vector<16x512xf32> to vector<16x128xf32>
    %39 = math.tanh %38 : vector<16x128xf32>
    %40 = vector.extract_strided_slice %31 {offsets = [0, 384], sizes = [16, 128], strides = [1, 1]} : vector<16x512xf32> to vector<16x128xf32>
    %41 = arith.negf %40 : vector<16x128xf32>
    %42 = math.exp %41 : vector<16x128xf32>
    %cst_10 = arith.constant 1.000000e+00 : f32
    %43 = vector.broadcast %cst_10 : f32 to vector<16x128xf32>
    %44 = arith.addf %43, %42 : vector<16x128xf32>
    %45 = arith.divf %43, %44 : vector<16x128xf32>
    %46 = vector.extract_strided_slice %37 {offsets = [0, 128], sizes = [16, 128], strides = [1, 1]} : vector<16x256xf32> to vector<16x128xf32>
    %47 = arith.mulf %46, %22 : vector<16x128xf32>
    %48 = vector.extract_strided_slice %37 {offsets = [0, 0], sizes = [16, 128], strides = [1, 1]} : vector<16x256xf32> to vector<16x128xf32>
    %49 = arith.mulf %48, %39 : vector<16x128xf32>
    %50 = arith.addf %47, %49 : vector<16x128xf32>
    %51 = math.tanh %50 : vector<16x128xf32>
    %52 = arith.mulf %45, %51 : vector<16x128xf32>
    %53 = arith.truncf %52 : vector<16x128xf32> to vector<16x128xbf16>
    %c0_11 = arith.constant 0 : index
    %c0_12 = arith.constant 0 : index
    %54 = vector.load %arg2[%c0_11, %c0_12] : memref<128x512xbf16, #tpu.memory_space<vmem>>, vector<128x512xbf16>
    %cst_13 = arith.constant dense<0.000000e+00> : vector<16x512xf32>
    %55 = tpu.matmul %53, %54, %cst_13 {dimension_numbers = #tpu.dot_dimension_numbers<[1], [0], [0], [1], [0, 0, 1, 1], [], []>} : vector<16x128xbf16>, vector<128x512xbf16>, vector<16x512xf32> -> vector<16x512xf32>
    %c2 = arith.constant 2 : index
    %c0_14 = arith.constant 0 : index
    %c0_15 = arith.constant 0 : index
    %56 = vector.load %arg1[%c2, %c0_14, %c0_15] : memref<8x16x512xbf16, #tpu.memory_space<vmem>>, vector<1x16x512xbf16>
    %57 = vector.shape_cast %56 : vector<1x16x512xbf16> to vector<16x512xbf16>
    %58 = arith.extf %57 : vector<16x512xbf16> to vector<16x512xf32>
    %59 = arith.addf %58, %55 : vector<16x512xf32>
    %60 = vector.extract_strided_slice %59 {offsets = [0, 0], sizes = [16, 256], strides = [1, 1]} : vector<16x512xf32> to vector<16x256xf32>
    %61 = arith.negf %60 : vector<16x256xf32>
    %62 = math.exp %61 : vector<16x256xf32>
    %cst_16 = arith.constant 1.000000e+00 : f32
    %63 = vector.broadcast %cst_16 : f32 to vector<16x256xf32>
    %64 = arith.addf %63, %62 : vector<16x256xf32>
    %65 = arith.divf %63, %64 : vector<16x256xf32>
    %66 = vector.extract_strided_slice %59 {offsets = [0, 256], sizes = [16, 128], strides = [1, 1]} : vector<16x512xf32> to vector<16x128xf32>
    %67 = math.tanh %66 : vector<16x128xf32>
    %68 = vector.extract_strided_slice %59 {offsets = [0, 384], sizes = [16, 128], strides = [1, 1]} : vector<16x512xf32> to vector<16x128xf32>
    %69 = arith.negf %68 : vector<16x128xf32>
    %70 = math.exp %69 : vector<16x128xf32>
    %cst_17 = arith.constant 1.000000e+00 : f32
    %71 = vector.broadcast %cst_17 : f32 to vector<16x128xf32>
    %72 = arith.addf %71, %70 : vector<16x128xf32>
    %73 = arith.divf %71, %72 : vector<16x128xf32>
    %74 = vector.extract_strided_slice %65 {offsets = [0, 128], sizes = [16, 128], strides = [1, 1]} : vector<16x256xf32> to vector<16x128xf32>
    %75 = arith.mulf %74, %50 : vector<16x128xf32>
    %76 = vector.extract_strided_slice %65 {offsets = [0, 0], sizes = [16, 128], strides = [1, 1]} : vector<16x256xf32> to vector<16x128xf32>
    %77 = arith.mulf %76, %67 : vector<16x128xf32>
    %78 = arith.addf %75, %77 : vector<16x128xf32>
    %79 = math.tanh %78 : vector<16x128xf32>
    %80 = arith.mulf %73, %79 : vector<16x128xf32>
    %81 = arith.truncf %80 : vector<16x128xf32> to vector<16x128xbf16>
    %c0_18 = arith.constant 0 : index
    %c0_19 = arith.constant 0 : index
    %82 = vector.load %arg2[%c0_18, %c0_19] : memref<128x512xbf16, #tpu.memory_space<vmem>>, vector<128x512xbf16>
    %cst_20 = arith.constant dense<0.000000e+00> : vector<16x512xf32>
    %83 = tpu.matmul %81, %82, %cst_20 {dimension_numbers = #tpu.dot_dimension_numbers<[1], [0], [0], [1], [0, 0, 1, 1], [], []>} : vector<16x128xbf16>, vector<128x512xbf16>, vector<16x512xf32> -> vector<16x512xf32>
    %c3 = arith.constant 3 : index
    %c0_21 = arith.constant 0 : index
    %c0_22 = arith.constant 0 : index
    %84 = vector.load %arg1[%c3, %c0_21, %c0_22] : memref<8x16x512xbf16, #tpu.memory_space<vmem>>, vector<1x16x512xbf16>
    %85 = vector.shape_cast %84 : vector<1x16x512xbf16> to vector<16x512xbf16>
    %86 = arith.extf %85 : vector<16x512xbf16> to vector<16x512xf32>
    %87 = arith.addf %86, %83 : vector<16x512xf32>
    %88 = vector.extract_strided_slice %87 {offsets = [0, 0], sizes = [16, 256], strides = [1, 1]} : vector<16x512xf32> to vector<16x256xf32>
    %89 = arith.negf %88 : vector<16x256xf32>
    %90 = math.exp %89 : vector<16x256xf32>
    %cst_23 = arith.constant 1.000000e+00 : f32
    %91 = vector.broadcast %cst_23 : f32 to vector<16x256xf32>
    %92 = arith.addf %91, %90 : vector<16x256xf32>
    %93 = arith.divf %91, %92 : vector<16x256xf32>
    %94 = vector.extract_strided_slice %87 {offsets = [0, 256], sizes = [16, 128], strides = [1, 1]} : vector<16x512xf32> to vector<16x128xf32>
    %95 = math.tanh %94 : vector<16x128xf32>
    %96 = vector.extract_strided_slice %87 {offsets = [0, 384], sizes = [16, 128], strides = [1, 1]} : vector<16x512xf32> to vector<16x128xf32>
    %97 = arith.negf %96 : vector<16x128xf32>
    %98 = math.exp %97 : vector<16x128xf32>
    %cst_24 = arith.constant 1.000000e+00 : f32
    %99 = vector.broadcast %cst_24 : f32 to vector<16x128xf32>
    %100 = arith.addf %99, %98 : vector<16x128xf32>
    %101 = arith.divf %99, %100 : vector<16x128xf32>
    %102 = vector.extract_strided_slice %93 {offsets = [0, 128], sizes = [16, 128], strides = [1, 1]} : vector<16x256xf32> to vector<16x128xf32>
    %103 = arith.mulf %102, %78 : vector<16x128xf32>
    %104 = vector.extract_strided_slice %93 {offsets = [0, 0], sizes = [16, 128], strides = [1, 1]} : vector<16x256xf32> to vector<16x128xf32>
    %105 = arith.mulf %104, %95 : vector<16x128xf32>
    %106 = arith.addf %103, %105 : vector<16x128xf32>
    %107 = math.tanh %106 : vector<16x128xf32>
    %108 = arith.mulf %101, %107 : vector<16x128xf32>
    %109 = arith.truncf %108 : vector<16x128xf32> to vector<16x128xbf16>
    %c0_25 = arith.constant 0 : index
    %c0_26 = arith.constant 0 : index
    %110 = vector.load %arg2[%c0_25, %c0_26] : memref<128x512xbf16, #tpu.memory_space<vmem>>, vector<128x512xbf16>
    %cst_27 = arith.constant dense<0.000000e+00> : vector<16x512xf32>
    %111 = tpu.matmul %109, %110, %cst_27 {dimension_numbers = #tpu.dot_dimension_numbers<[1], [0], [0], [1], [0, 0, 1, 1], [], []>} : vector<16x128xbf16>, vector<128x512xbf16>, vector<16x512xf32> -> vector<16x512xf32>
    %c4 = arith.constant 4 : index
    %c0_28 = arith.constant 0 : index
    %c0_29 = arith.constant 0 : index
    %112 = vector.load %arg1[%c4, %c0_28, %c0_29] : memref<8x16x512xbf16, #tpu.memory_space<vmem>>, vector<1x16x512xbf16>
    %113 = vector.shape_cast %112 : vector<1x16x512xbf16> to vector<16x512xbf16>
    %114 = arith.extf %113 : vector<16x512xbf16> to vector<16x512xf32>
    %115 = arith.addf %114, %111 : vector<16x512xf32>
    %116 = vector.extract_strided_slice %115 {offsets = [0, 0], sizes = [16, 256], strides = [1, 1]} : vector<16x512xf32> to vector<16x256xf32>
    %117 = arith.negf %116 : vector<16x256xf32>
    %118 = math.exp %117 : vector<16x256xf32>
    %cst_30 = arith.constant 1.000000e+00 : f32
    %119 = vector.broadcast %cst_30 : f32 to vector<16x256xf32>
    %120 = arith.addf %119, %118 : vector<16x256xf32>
    %121 = arith.divf %119, %120 : vector<16x256xf32>
    %122 = vector.extract_strided_slice %115 {offsets = [0, 256], sizes = [16, 128], strides = [1, 1]} : vector<16x512xf32> to vector<16x128xf32>
    %123 = math.tanh %122 : vector<16x128xf32>
    %124 = vector.extract_strided_slice %115 {offsets = [0, 384], sizes = [16, 128], strides = [1, 1]} : vector<16x512xf32> to vector<16x128xf32>
    %125 = arith.negf %124 : vector<16x128xf32>
    %126 = math.exp %125 : vector<16x128xf32>
    %cst_31 = arith.constant 1.000000e+00 : f32
    %127 = vector.broadcast %cst_31 : f32 to vector<16x128xf32>
    %128 = arith.addf %127, %126 : vector<16x128xf32>
    %129 = arith.divf %127, %128 : vector<16x128xf32>
    %130 = vector.extract_strided_slice %121 {offsets = [0, 128], sizes = [16, 128], strides = [1, 1]} : vector<16x256xf32> to vector<16x128xf32>
    %131 = arith.mulf %130, %106 : vector<16x128xf32>
    %132 = vector.extract_strided_slice %121 {offsets = [0, 0], sizes = [16, 128], strides = [1, 1]} : vector<16x256xf32> to vector<16x128xf32>
    %133 = arith.mulf %132, %123 : vector<16x128xf32>
    %134 = arith.addf %131, %133 : vector<16x128xf32>
    %135 = math.tanh %134 : vector<16x128xf32>
    %136 = arith.mulf %129, %135 : vector<16x128xf32>
    %137 = arith.truncf %136 : vector<16x128xf32> to vector<16x128xbf16>
    %c0_32 = arith.constant 0 : index
    %c0_33 = arith.constant 0 : index
    %138 = vector.load %arg2[%c0_32, %c0_33] : memref<128x512xbf16, #tpu.memory_space<vmem>>, vector<128x512xbf16>
    %cst_34 = arith.constant dense<0.000000e+00> : vector<16x512xf32>
    %139 = tpu.matmul %137, %138, %cst_34 {dimension_numbers = #tpu.dot_dimension_numbers<[1], [0], [0], [1], [0, 0, 1, 1], [], []>} : vector<16x128xbf16>, vector<128x512xbf16>, vector<16x512xf32> -> vector<16x512xf32>
    %c5 = arith.constant 5 : index
    %c0_35 = arith.constant 0 : index
    %c0_36 = arith.constant 0 : index
    %140 = vector.load %arg1[%c5, %c0_35, %c0_36] : memref<8x16x512xbf16, #tpu.memory_space<vmem>>, vector<1x16x512xbf16>
    %141 = vector.shape_cast %140 : vector<1x16x512xbf16> to vector<16x512xbf16>
    %142 = arith.extf %141 : vector<16x512xbf16> to vector<16x512xf32>
    %143 = arith.addf %142, %139 : vector<16x512xf32>
    %144 = vector.extract_strided_slice %143 {offsets = [0, 0], sizes = [16, 256], strides = [1, 1]} : vector<16x512xf32> to vector<16x256xf32>
    %145 = arith.negf %144 : vector<16x256xf32>
    %146 = math.exp %145 : vector<16x256xf32>
    %cst_37 = arith.constant 1.000000e+00 : f32
    %147 = vector.broadcast %cst_37 : f32 to vector<16x256xf32>
    %148 = arith.addf %147, %146 : vector<16x256xf32>
    %149 = arith.divf %147, %148 : vector<16x256xf32>
    %150 = vector.extract_strided_slice %143 {offsets = [0, 256], sizes = [16, 128], strides = [1, 1]} : vector<16x512xf32> to vector<16x128xf32>
    %151 = math.tanh %150 : vector<16x128xf32>
    %152 = vector.extract_strided_slice %143 {offsets = [0, 384], sizes = [16, 128], strides = [1, 1]} : vector<16x512xf32> to vector<16x128xf32>
    %153 = arith.negf %152 : vector<16x128xf32>
    %154 = math.exp %153 : vector<16x128xf32>
    %cst_38 = arith.constant 1.000000e+00 : f32
    %155 = vector.broadcast %cst_38 : f32 to vector<16x128xf32>
    %156 = arith.addf %155, %154 : vector<16x128xf32>
    %157 = arith.divf %155, %156 : vector<16x128xf32>
    %158 = vector.extract_strided_slice %149 {offsets = [0, 128], sizes = [16, 128], strides = [1, 1]} : vector<16x256xf32> to vector<16x128xf32>
    %159 = arith.mulf %158, %134 : vector<16x128xf32>
    %160 = vector.extract_strided_slice %149 {offsets = [0, 0], sizes = [16, 128], strides = [1, 1]} : vector<16x256xf32> to vector<16x128xf32>
    %161 = arith.mulf %160, %151 : vector<16x128xf32>
    %162 = arith.addf %159, %161 : vector<16x128xf32>
    %163 = math.tanh %162 : vector<16x128xf32>
    %164 = arith.mulf %157, %163 : vector<16x128xf32>
    %165 = arith.truncf %164 : vector<16x128xf32> to vector<16x128xbf16>
    %c0_39 = arith.constant 0 : index
    %c0_40 = arith.constant 0 : index
    %166 = vector.load %arg2[%c0_39, %c0_40] : memref<128x512xbf16, #tpu.memory_space<vmem>>, vector<128x512xbf16>
    %cst_41 = arith.constant dense<0.000000e+00> : vector<16x512xf32>
    %167 = tpu.matmul %165, %166, %cst_41 {dimension_numbers = #tpu.dot_dimension_numbers<[1], [0], [0], [1], [0, 0, 1, 1], [], []>} : vector<16x128xbf16>, vector<128x512xbf16>, vector<16x512xf32> -> vector<16x512xf32>
    %c6 = arith.constant 6 : index
    %c0_42 = arith.constant 0 : index
    %c0_43 = arith.constant 0 : index
    %168 = vector.load %arg1[%c6, %c0_42, %c0_43] : memref<8x16x512xbf16, #tpu.memory_space<vmem>>, vector<1x16x512xbf16>
    %169 = vector.shape_cast %168 : vector<1x16x512xbf16> to vector<16x512xbf16>
    %170 = arith.extf %169 : vector<16x512xbf16> to vector<16x512xf32>
    %171 = arith.addf %170, %167 : vector<16x512xf32>
    %172 = vector.extract_strided_slice %171 {offsets = [0, 0], sizes = [16, 256], strides = [1, 1]} : vector<16x512xf32> to vector<16x256xf32>
    %173 = arith.negf %172 : vector<16x256xf32>
    %174 = math.exp %173 : vector<16x256xf32>
    %cst_44 = arith.constant 1.000000e+00 : f32
    %175 = vector.broadcast %cst_44 : f32 to vector<16x256xf32>
    %176 = arith.addf %175, %174 : vector<16x256xf32>
    %177 = arith.divf %175, %176 : vector<16x256xf32>
    %178 = vector.extract_strided_slice %171 {offsets = [0, 256], sizes = [16, 128], strides = [1, 1]} : vector<16x512xf32> to vector<16x128xf32>
    %179 = math.tanh %178 : vector<16x128xf32>
    %180 = vector.extract_strided_slice %171 {offsets = [0, 384], sizes = [16, 128], strides = [1, 1]} : vector<16x512xf32> to vector<16x128xf32>
    %181 = arith.negf %180 : vector<16x128xf32>
    %182 = math.exp %181 : vector<16x128xf32>
    %cst_45 = arith.constant 1.000000e+00 : f32
    %183 = vector.broadcast %cst_45 : f32 to vector<16x128xf32>
    %184 = arith.addf %183, %182 : vector<16x128xf32>
    %185 = arith.divf %183, %184 : vector<16x128xf32>
    %186 = vector.extract_strided_slice %177 {offsets = [0, 128], sizes = [16, 128], strides = [1, 1]} : vector<16x256xf32> to vector<16x128xf32>
    %187 = arith.mulf %186, %162 : vector<16x128xf32>
    %188 = vector.extract_strided_slice %177 {offsets = [0, 0], sizes = [16, 128], strides = [1, 1]} : vector<16x256xf32> to vector<16x128xf32>
    %189 = arith.mulf %188, %179 : vector<16x128xf32>
    %190 = arith.addf %187, %189 : vector<16x128xf32>
    %191 = math.tanh %190 : vector<16x128xf32>
    %192 = arith.mulf %185, %191 : vector<16x128xf32>
    %193 = arith.truncf %192 : vector<16x128xf32> to vector<16x128xbf16>
    %c0_46 = arith.constant 0 : index
    %c0_47 = arith.constant 0 : index
    %194 = vector.load %arg2[%c0_46, %c0_47] : memref<128x512xbf16, #tpu.memory_space<vmem>>, vector<128x512xbf16>
    %cst_48 = arith.constant dense<0.000000e+00> : vector<16x512xf32>
    %195 = tpu.matmul %193, %194, %cst_48 {dimension_numbers = #tpu.dot_dimension_numbers<[1], [0], [0], [1], [0, 0, 1, 1], [], []>} : vector<16x128xbf16>, vector<128x512xbf16>, vector<16x512xf32> -> vector<16x512xf32>
    %c7 = arith.constant 7 : index
    %c0_49 = arith.constant 0 : index
    %c0_50 = arith.constant 0 : index
    %196 = vector.load %arg1[%c7, %c0_49, %c0_50] : memref<8x16x512xbf16, #tpu.memory_space<vmem>>, vector<1x16x512xbf16>
    %197 = vector.shape_cast %196 : vector<1x16x512xbf16> to vector<16x512xbf16>
    %198 = arith.extf %197 : vector<16x512xbf16> to vector<16x512xf32>
    %199 = arith.addf %198, %195 : vector<16x512xf32>
    %200 = vector.extract_strided_slice %199 {offsets = [0, 0], sizes = [16, 256], strides = [1, 1]} : vector<16x512xf32> to vector<16x256xf32>
    %201 = arith.negf %200 : vector<16x256xf32>
    %202 = math.exp %201 : vector<16x256xf32>
    %cst_51 = arith.constant 1.000000e+00 : f32
    %203 = vector.broadcast %cst_51 : f32 to vector<16x256xf32>
    %204 = arith.addf %203, %202 : vector<16x256xf32>
    %205 = arith.divf %203, %204 : vector<16x256xf32>
    %206 = vector.extract_strided_slice %199 {offsets = [0, 256], sizes = [16, 128], strides = [1, 1]} : vector<16x512xf32> to vector<16x128xf32>
    %207 = math.tanh %206 : vector<16x128xf32>
    %208 = vector.extract_strided_slice %199 {offsets = [0, 384], sizes = [16, 128], strides = [1, 1]} : vector<16x512xf32> to vector<16x128xf32>
    %209 = arith.negf %208 : vector<16x128xf32>
    %210 = math.exp %209 : vector<16x128xf32>
    %cst_52 = arith.constant 1.000000e+00 : f32
    %211 = vector.broadcast %cst_52 : f32 to vector<16x128xf32>
    %212 = arith.addf %211, %210 : vector<16x128xf32>
    %213 = arith.divf %211, %212 : vector<16x128xf32>
    %214 = vector.extract_strided_slice %205 {offsets = [0, 128], sizes = [16, 128], strides = [1, 1]} : vector<16x256xf32> to vector<16x128xf32>
    %215 = arith.mulf %214, %190 : vector<16x128xf32>
    %216 = vector.extract_strided_slice %205 {offsets = [0, 0], sizes = [16, 128], strides = [1, 1]} : vector<16x256xf32> to vector<16x128xf32>
    %217 = arith.mulf %216, %207 : vector<16x128xf32>
    %218 = arith.addf %215, %217 : vector<16x128xf32>
    %219 = math.tanh %218 : vector<16x128xf32>
    %220 = arith.mulf %213, %219 : vector<16x128xf32>
    %221 = arith.truncf %220 : vector<16x128xf32> to vector<16x128xbf16>
    %c0_53 = arith.constant 0 : index
    %c0_54 = arith.constant 0 : index
    %222 = vector.load %arg3[%c0_53, %c0_54] : memref<128x128xbf16, #tpu.memory_space<vmem>>, vector<128x128xbf16>
    %cst_55 = arith.constant dense<0.000000e+00> : vector<16x128xf32>
    %223 = tpu.matmul %221, %222, %cst_55 {dimension_numbers = #tpu.dot_dimension_numbers<[1], [0], [0], [1], [0, 0, 1, 1], [], []>} : vector<16x128xbf16>, vector<128x128xbf16>, vector<16x128xf32> -> vector<16x128xf32>
    %c0_56 = arith.constant 0 : index
    %c0_57 = arith.constant 0 : index
    %224 = vector.load %arg4[%c0_56, %c0_57] : memref<1x128xf32, #tpu.memory_space<vmem>>, vector<1x128xf32>
    %225 = vector.broadcast %224 : vector<1x128xf32> to vector<16x128xf32>
    %226 = arith.addf %223, %225 : vector<16x128xf32>
    %c0_58 = arith.constant 0 : index
    %c0_59 = arith.constant 0 : index
    %227 = vector.load %arg5[%c0_58, %c0_59] : memref<16x128xf32, #tpu.memory_space<vmem>>, vector<16x128xf32>
    tpu.vector_store %arg5[%c0_58, %c0_59], %226 {strides = array<i32>} : memref<16x128xf32, #tpu.memory_space<vmem>>, vector<16x128xf32>,
    return
  }
  func.func @transform_0(%arg0: i32) -> (i32, i32, i32) {
    %c0_i32 = arith.constant 0 : i32
    %c0_i32_0 = arith.constant 0 : i32
    %c0_i32_1 = arith.constant 0 : i32
    return %c0_i32, %arg0, %c0_i32_0 : i32, i32, i32
  }
  func.func @transform_1(%arg0: i32) -> (i32, i32) {
    %c0_i32 = arith.constant 0 : i32
    %c0_i32_0 = arith.constant 0 : i32
    %c0_i32_1 = arith.constant 0 : i32
    return %c0_i32, %c0_i32_0 : i32, i32
  }
  func.func @transform_2(%arg0: i32) -> (i32, i32) {
    %c0_i32 = arith.constant 0 : i32
    %c0_i32_0 = arith.constant 0 : i32
    %c0_i32_1 = arith.constant 0 : i32
    return %c0_i32, %c0_i32_0 : i32, i32
  }
  func.func @transform_3(%arg0: i32) -> (i32, i32) {
    %c0_i32 = arith.constant 0 : i32
    %c0_i32_0 = arith.constant 0 : i32
    %c0_i32_1 = arith.constant 0 : i32
    return %c0_i32, %c0_i32_0 : i32, i32
  }
  func.func @transform_4(%arg0: i32) -> (i32, i32) {
    %c0_i32 = arith.constant 0 : i32
    %c0_i32_0 = arith.constant 0 : i32
    return %arg0, %c0_i32 : i32, i32
  }
}

</mosaic_0001>

<llo_original>
// kernel: tpu_custom_call.1
$region0: #{tpu_custom_call.1}
  #allocation0 [shape = 'u32[]', space=smem, size = 0x4, offset = 0x4, fixed_abs, tag = 'smem constant byte address 0x4 - core index']
  #allocation1 [shape = 'u32[144,128]{1,0:T(1,128)}', space=vmem, size = 0x12000, scoped, tag = 'internal scratch']
  %s0 = inlined_call_operand.hbm [shape: bf16[8,16,512], index: 0, kind: input, shape index: {}]
  %s1 = inlined_call_operand.hbm [shape: bf16[128,512], index: 1, kind: input, shape index: {}]
  %s2 = inlined_call_operand.hbm [shape: bf16[128,128], index: 2, kind: input, shape index: {}]
  %s3 = inlined_call_operand.vmem [shape: f32[1,128], index: 3, kind: input, shape index: {}]
  %s4 = inlined_call_operand.hbm [shape: f32[16,128], index: 4, kind: output, shape index: {}]
  %s5 = sld [smem:[#allocation0]]
  $region38: #{tpu_custom_call.1} parent=0
    _
  %s7 = ssub.s32 1, %s5
  %s8 = scalar_select 0, %s7, %s5
  $region1: #{tpu_custom_call.1} parent=0
    #allocation2 [shape = 'u8[131072]{0}', space=vmem, size = 0x20000, scoped, tag = 'input window, operand 0, single buffered']
    #allocation3 [shape = 's32[1]{0}', space=sflag, size = 0x4, scoped, tag = 'scoped memory for tpu_custom_call.1']
    #allocation4 [shape = 's32[1]{0}', space=sflag, size = 0x4, scoped, tag = 'scoped memory for tpu_custom_call.1']
    #allocation5 [shape = 'u8[131072]{0}', space=vmem, size = 0x20000, scoped, tag = 'input window, operand 1, single buffered']
    #allocation6 [shape = 's32[1]{0}', space=sflag, size = 0x4, scoped, tag = 'scoped memory for tpu_custom_call.1']
    #allocation7 [shape = 'u8[32768]{0}', space=vmem, size = 0x8000, scoped, tag = 'input window, operand 2, single buffered']
    #allocation8 [shape = 'u8[8192]{0}', space=vmem, size = 0x2000, scoped, tag = 'output window, operand 0, single buffered']
    %9 = vsyncpa [#allocation3], 0
    %10 = vsyncpa [#allocation6], 0
    %11 = vsyncpa [#allocation4], 0
    // Predicated region
    $region2: #{tpu_custom_call.1} parent=1 // pred_check
      _
    $region3: #{tpu_custom_call.1} parent=1 // pred_check_branch
      %13 = sbr.rel (0) target = $region5
    $region4: #{tpu_custom_call.1} parent=1 // pred_region
      %s15 = ssub.s32 4096, 4096
      %16 = vsyncadd [#allocation3], %s15
      %s17 = sshll.u32 [#allocation2], 4
      %s18 = int_to_ptr.vmem [resolvable:$true] %s17
      %23 = dma.hbm_to_vmem [thread:$0]  %s0, 4096, %s18, [#allocation3], 256, 256, 16
    $region5: #{tpu_custom_call.1} parent=1 // pred_fallthru
      _
    // Predicated region
    $region6: #{tpu_custom_call.1} parent=1 // pred_check
      _
    $region7: #{tpu_custom_call.1} parent=1 // pred_check_branch
      %25 = sbr.rel (0) target = $region9
    $region8: #{tpu_custom_call.1} parent=1 // pred_region
      %s27 = ssub.s32 4096, 4096
      %28 = vsyncadd [#allocation6], %s27
      %s29 = sshll.u32 [#allocation5], 4
      %s30 = int_to_ptr.vmem [resolvable:$true] %s29
      %35 = dma.hbm_to_vmem [thread:$0]  %s1, 4096, %s30, [#allocation6], 256, 256, 16
    $region9: #{tpu_custom_call.1} parent=1 // pred_fallthru
      _
    // Predicated region
    $region10: #{tpu_custom_call.1} parent=1 // pred_check
      _
    $region11: #{tpu_custom_call.1} parent=1 // pred_check_branch
      %37 = sbr.rel (0) target = $region13
    $region12: #{tpu_custom_call.1} parent=1 // pred_region
      %s39 = ssub.s32 1024, 1024
      %40 = vsyncadd [#allocation6], %s39
      %s41 = sshll.u32 [#allocation7], 4
      %s42 = int_to_ptr.vmem [resolvable:$true] %s41
      %47 = dma.hbm_to_vmem [thread:$0]  %s2, 1024, %s42, [#allocation6], 64, 64, 4
    $region13: #{tpu_custom_call.1} parent=1 // pred_fallthru
      _
    // Predicated region
    $region14: #{tpu_custom_call.1} parent=1 // pred_check
      _
    $region15: #{tpu_custom_call.1} parent=1 // pred_check_branch
      %49 = sbr.rel (0) target = $region17
    $region16: #{tpu_custom_call.1} parent=1 // pred_region
      _
    $region17: #{tpu_custom_call.1} parent=1 // pred_fallthru
      _
    // Predicated region
    $region18: #{tpu_custom_call.1} parent=1 // pred_check
      _
    $region19: #{tpu_custom_call.1} parent=1 // pred_check_branch
      %51 = sbr.rel (0) target = $region21
    $region20: #{tpu_custom_call.1} parent=1 // pred_region
      %52 = dma.done [#allocation3], 4096
    $region21: #{tpu_custom_call.1} parent=1 // pred_fallthru
      _
    // Predicated region
    $region22: #{tpu_custom_call.1} parent=1 // pred_check
      _
    $region23: #{tpu_custom_call.1} parent=1 // pred_check_branch
      %54 = sbr.rel (0) target = $region25
    $region24: #{tpu_custom_call.1} parent=1 // pred_region
      %55 = dma.done [#allocation6], 4096
    $region25: #{tpu_custom_call.1} parent=1 // pred_fallthru
      _
    // Predicated region
    $region26: #{tpu_custom_call.1} parent=1 // pred_check
      _
    $region27: #{tpu_custom_call.1} parent=1 // pred_check_branch
      %57 = sbr.rel (0) target = $region29
    $region28: #{tpu_custom_call.1} parent=1 // pred_region
      %58 = dma.done [#allocation6], 1024
    $region29: #{tpu_custom_call.1} parent=1 // pred_fallthru
      _
    %v60 = vld [vmem:[#allocation2] sm:$0xff]
    %v61 = vld [vmem:[#allocation2 + $0x8] sm:$0xff]
    %v62 = vld [vmem:[#allocation2 + $0x10] sm:$0xff]
    %v63 = vld [vmem:[#allocation2 + $0x18] sm:$0xff]
    %v64 = vunpack.c.l.bf16 %v60
    %v65 = vunpack.c.h.bf16 %v60
    %v66 = vunpack.c.l.bf16 %v61
    %v67 = vunpack.c.h.bf16 %v61
    %v68 = vunpack.c.l.bf16 %v62
    %v69 = vunpack.c.h.bf16 %v62
    %v70 = vunpack.c.l.bf16 %v63
    %v71 = vunpack.c.h.bf16 %v63
    %v72 = vxor.u32 %v64, 2147483648
    %v73 = vxor.u32 %v65, 2147483648
    %v74 = vxor.u32 %v68, 2147483648
    %v75 = vxor.u32 %v69, 2147483648
    %v76 = vmul.f32 %v72, 1.442695
    %v77 = vpow.pop %v76
    %v78 = vmul.f32 %v73, 1.442695
    %v79 = vpow.pop %v78
    %v80 = vmul.f32 %v74, 1.442695
    %v81 = vpow.pop %v80
    %v82 = vmul.f32 %v75, 1.442695
    %v83 = vpow.pop %v82
    %v84 = vadd.f32 %v77, 1.0
    %v85 = vadd.f32 %v79, 1.0
    %v86 = vadd.f32 %v81, 1.0
    %v87 = vadd.f32 %v83, 1.0
    %v88 = vrcp.pop %v84
    %v89 = vmul.f32 1.0, %v88
    %v90 = vrcp.pop %v85
    %v91 = vmul.f32 1.0, %v90
    %v92 = vrcp.pop %v86
    %v93 = vmul.f32 1.0, %v92
    %v94 = vrcp.pop %v87
    %v95 = vmul.f32 1.0, %v94
    %v96 = vtanh.pop %v66
    %v97 = vtanh.pop %v70
    %v98 = vxor.u32 %v67, 2147483648
    %v99 = vxor.u32 %v71, 2147483648
    %v100 = vmul.f32 %v98, 1.442695
    %v101 = vpow.pop %v100
    %v102 = vmul.f32 %v99, 1.442695
    %v103 = vpow.pop %v102
    %v104 = vadd.f32 %v101, 1.0
    %v105 = vadd.f32 %v103, 1.0
    %v106 = vrcp.pop %v104
    %v107 = vmul.f32 1.0, %v106
    %v108 = vrcp.pop %v105
    %v109 = vmul.f32 1.0, %v108
    %v110 = vmul.f32 %v91, 0.0
    %v111 = vmul.f32 %v95, 0.0
    %v112 = vmul.f32 %v89, %v96
    %v113 = vmul.f32 %v93, %v97
    %v114 = vadd.f32 %v110, %v112
    %v115 = vadd.f32 %v111, %v113
    %v116 = vtanh.pop %v114
    %v117 = vtanh.pop %v115
    %v118 = vmul.f32 %v107, %v116
    %v119 = vmul.f32 %v109, %v117
    %v120 = vpack.c.bf16 %v119, %v118
    %v121 = vld [vmem:[#allocation5] sm:$0xff]
    %v122 = vld [vmem:[#allocation5 + $0x8] sm:$0xff]
    %v123 = vld [vmem:[#allocation5 + $0x10] sm:$0xff]
    %v124 = vld [vmem:[#allocation5 + $0x18] sm:$0xff]
    %v125 = vld [vmem:[#allocation5 + $0x20] sm:$0xff]
    %v126 = vld [vmem:[#allocation5 + $0x28] sm:$0xff]
    %v127 = vld [vmem:[#allocation5 + $0x30] sm:$0xff]
    %v128 = vld [vmem:[#allocation5 + $0x38] sm:$0xff]
    %v129 = vld [vmem:[#allocation5 + $0x40] sm:$0xff]
    %v130 = vld [vmem:[#allocation5 + $0x48] sm:$0xff]
    %v131 = vld [vmem:[#allocation5 + $0x50] sm:$0xff]
    %v132 = vld [vmem:[#allocation5 + $0x58] sm:$0xff]
    %v133 = vld [vmem:[#allocation5 + $0x60] sm:$0xff]
    %v134 = vld [vmem:[#allocation5 + $0x68] sm:$0xff]
    %v135 = vld [vmem:[#allocation5 + $0x70] sm:$0xff]
    %v136 = vld [vmem:[#allocation5 + $0x78] sm:$0xff]
    %v137 = vld [vmem:[#allocation5 + $0x80] sm:$0xff]
    %v138 = vld [vmem:[#allocation5 + $0x88] sm:$0xff]
    %v139 = vld [vmem:[#allocation5 + $0x90] sm:$0xff]
    %v140 = vld [vmem:[#allocation5 + $0x98] sm:$0xff]
    %v141 = vld [vmem:[#allocation5 + $0xa0] sm:$0xff]
    %v142 = vld [vmem:[#allocation5 + $0xa8] sm:$0xff]
    %v143 = vld [vmem:[#allocation5 + $0xb0] sm:$0xff]
    %v144 = vld [vmem:[#allocation5 + $0xb8] sm:$0xff]
    %v145 = vld [vmem:[#allocation5 + $0xc0] sm:$0xff]
    %v146 = vld [vmem:[#allocation5 + $0xc8] sm:$0xff]
    %v147 = vld [vmem:[#allocation5 + $0xd0] sm:$0xff]
    %v148 = vld [vmem:[#allocation5 + $0xd8] sm:$0xff]
    %v149 = vld [vmem:[#allocation5 + $0xe0] sm:$0xff]
    %v150 = vld [vmem:[#allocation5 + $0xe8] sm:$0xff]
    %v151 = vld [vmem:[#allocation5 + $0xf0] sm:$0xff]
    %v152 = vld [vmem:[#allocation5 + $0xf8] sm:$0xff]
    %v185 = vunpack.c.l.b16 %v121
    %v186 = vunpack.c.h.b16 %v121
    %v187 = vunpack.c.l.b16 %v122
    %v188 = vunpack.c.h.b16 %v122
    %v189 = vunpack.c.l.b16 %v123
    %v190 = vunpack.c.h.b16 %v123
    %v191 = vunpack.c.l.b16 %v124
    %v192 = vunpack.c.h.b16 %v124
    %v193 = vunpack.c.l.b16 %v125
    %v194 = vunpack.c.h.b16 %v125
    %v195 = vunpack.c.l.b16 %v126
    %v196 = vunpack.c.h.b16 %v126
    %v197 = vunpack.c.l.b16 %v127
    %v198 = vunpack.c.h.b16 %v127
    %v199 = vunpack.c.l.b16 %v128
    %v200 = vunpack.c.h.b16 %v128
    %v201 = vunpack.c.l.b16 %v129
    %v202 = vunpack.c.h.b16 %v129
    %v203 = vunpack.c.l.b16 %v130
    %v204 = vunpack.c.h.b16 %v130
    %v205 = vunpack.c.l.b16 %v131
    %v206 = vunpack.c.h.b16 %v131
    %v207 = vunpack.c.l.b16 %v132
    %v208 = vunpack.c.h.b16 %v132
    %v209 = vunpack.c.l.b16 %v133
    %v210 = vunpack.c.h.b16 %v133
    %v211 = vunpack.c.l.b16 %v134
    %v212 = vunpack.c.h.b16 %v134
    %v213 = vunpack.c.l.b16 %v135
    %v214 = vunpack.c.h.b16 %v135
    %v215 = vunpack.c.l.b16 %v136
    %v216 = vunpack.c.h.b16 %v136
    %v217 = vunpack.c.l.b16 %v137
    %v218 = vunpack.c.h.b16 %v137
    %v219 = vunpack.c.l.b16 %v138
    %v220 = vunpack.c.h.b16 %v138
    %v221 = vunpack.c.l.b16 %v139
    %v222 = vunpack.c.h.b16 %v139
    %v223 = vunpack.c.l.b16 %v140
    %v224 = vunpack.c.h.b16 %v140
    %v225 = vunpack.c.l.b16 %v141
    %v226 = vunpack.c.h.b16 %v141
    %v227 = vunpack.c.l.b16 %v142
    %v228 = vunpack.c.h.b16 %v142
    %v229 = vunpack.c.l.b16 %v143
    %v230 = vunpack.c.h.b16 %v143
    %v231 = vunpack.c.l.b16 %v144
    %v232 = vunpack.c.h.b16 %v144
    %v233 = vunpack.c.l.b16 %v145
    %v234 = vunpack.c.h.b16 %v145
    %v235 = vunpack.c.l.b16 %v146
    %v236 = vunpack.c.h.b16 %v146
    %v237 = vunpack.c.l.b16 %v147
    %v238 = vunpack.c.h.b16 %v147
    %v239 = vunpack.c.l.b16 %v148
    %v240 = vunpack.c.h.b16 %v148
    %v241 = vunpack.c.l.b16 %v149
    %v242 = vunpack.c.h.b16 %v149
    %v243 = vunpack.c.l.b16 %v150
    %v244 = vunpack.c.h.b16 %v150
    %v245 = vunpack.c.l.b16 %v151
    %v246 = vunpack.c.h.b16 %v151
    %v247 = vunpack.c.l.b16 %v152
    %v248 = vunpack.c.h.b16 %v152
    %v249 = vpack.c.b16 %v189, %v185
    %v250 = vpack.c.b16 %v190, %v186
    %v251 = vpack.c.b16 %v191, %v187
    %v252 = vpack.c.b16 %v192, %v188
    %v253 = vpack.c.b16 %v197, %v193
    %v254 = vpack.c.b16 %v198, %v194
    %v255 = vpack.c.b16 %v199, %v195
    %v256 = vpack.c.b16 %v200, %v196
    %v257 = vpack.c.b16 %v205, %v201
    %v258 = vpack.c.b16 %v206, %v202
    %v259 = vpack.c.b16 %v207, %v203
    %v260 = vpack.c.b16 %v208, %v204
    %v261 = vpack.c.b16 %v213, %v209
    %v262 = vpack.c.b16 %v214, %v210
    %v263 = vpack.c.b16 %v215, %v211
    %v264 = vpack.c.b16 %v216, %v212
    %v265 = vpack.c.b16 %v221, %v217
    %v266 = vpack.c.b16 %v222, %v218
    %v267 = vpack.c.b16 %v223, %v219
    %v268 = vpack.c.b16 %v224, %v220
    %v269 = vpack.c.b16 %v229, %v225
    %v270 = vpack.c.b16 %v230, %v226
    %v271 = vpack.c.b16 %v231, %v227
    %v272 = vpack.c.b16 %v232, %v228
    %v273 = vpack.c.b16 %v237, %v233
    %v274 = vpack.c.b16 %v238, %v234
    %v275 = vpack.c.b16 %v239, %v235
    %v276 = vpack.c.b16 %v240, %v236
    %v277 = vpack.c.b16 %v245, %v241
    %v278 = vpack.c.b16 %v246, %v242
    %v279 = vpack.c.b16 %v247, %v243
    %v280 = vpack.c.b16 %v248, %v244
    %313 = vmatprep.subr.bf16.mxu0 %v250
    %314 = vmatpush1.bf16.msra.mxu0 %v249
    %315 = vmatprep.subr.bf16.mxu0 %v254
    %316 = vmatpush1.bf16.msra.mxu0 %v253
    %317 = vmatprep.subr.bf16.mxu0 %v258
    %318 = vmatpush1.bf16.msra.mxu0 %v257
    %319 = vmatprep.subr.bf16.mxu0 %v262
    %320 = vmatpush1.bf16.msra.mxu0 %v261
    %321 = vmatprep.subr.bf16.mxu0 %v266
    %322 = vmatpush1.bf16.msra.mxu0 %v265
    %323 = vmatprep.subr.bf16.mxu0 %v270
    %324 = vmatpush1.bf16.msra.mxu0 %v269
    %325 = vmatprep.subr.bf16.mxu0 %v274
    %326 = vmatpush1.bf16.msra.mxu0 %v273
    %327 = vmatprep.subr.bf16.mxu0 %v278
    %328 = vmatpush1.bf16.msra.mxu0 %v277
    %329 = vmatprep.subr.bf16.mxu0 0
    %330 = vmatpush1.bf16.msra.mxu0 0
    %331 = vmatprep.subr.bf16.mxu0 0
    %332 = vmatpush1.bf16.msra.mxu0 0
    %333 = vmatprep.subr.bf16.mxu0 0
    %334 = vmatpush1.bf16.msra.mxu0 0
    %335 = vmatprep.subr.bf16.mxu0 0
    %336 = vmatpush1.bf16.msra.mxu0 0
    %337 = vmatprep.subr.bf16.mxu0 0
    %338 = vmatpush1.bf16.msra.mxu0 0
    %339 = vmatprep.subr.bf16.mxu0 0
    %340 = vmatpush1.bf16.msra.mxu0 0
    %341 = vmatprep.subr.bf16.mxu0 0
    %342 = vmatpush1.bf16.msra.mxu0 0
    %343 = vmatprep.subr.bf16.mxu0 0
    %344 = vmatpush1.bf16.msra.mxu0 0
    %345 = vmatprep.mubr.bf16.mxu0 0
    %346 = vmatmul.mubr.bf16.gmra.mrb[0].mxu0 %v120
    %v347 = vpop.f32.mrb[0].mxu0
    %v348 = vadd.f32 0.0, %v347
    %v349 = vpop.f32.mrb[0].mxu0
    %v350 = vadd.f32 0.0, %v349
    %v351 = vpop.f32.mrb[0].mxu0
    %v352 = vadd.f32 0.0, %v351
    %v353 = vpop.f32.mrb[0].mxu0
    %v354 = vadd.f32 0.0, %v353
    %355 = vdwg.mxu0
    %356 = vmatprep.subr.bf16.mxu0 %v252
    %357 = vmatpush1.bf16.msra.mxu0 %v251
    %358 = vmatprep.subr.bf16.mxu0 %v256
    %359 = vmatpush1.bf16.msra.mxu0 %v255
    %360 = vmatprep.subr.bf16.mxu0 %v260
    %361 = vmatpush1.bf16.msra.mxu0 %v259
    %362 = vmatprep.subr.bf16.mxu0 %v264
    %363 = vmatpush1.bf16.msra.mxu0 %v263
    %364 = vmatprep.subr.bf16.mxu0 %v268
    %365 = vmatpush1.bf16.msra.mxu0 %v267
    %366 = vmatprep.subr.bf16.mxu0 %v272
    %367 = vmatpush1.bf16.msra.mxu0 %v271
    %368 = vmatprep.subr.bf16.mxu0 %v276
    %369 = vmatpush1.bf16.msra.mxu0 %v275
    %370 = vmatprep.subr.bf16.mxu0 %v280
    %371 = vmatpush1.bf16.msra.mxu0 %v279
    %372 = vmatprep.subr.bf16.mxu0 0
    %373 = vmatpush1.bf16.msra.mxu0 0
    %374 = vmatprep.subr.bf16.mxu0 0
    %375 = vmatpush1.bf16.msra.mxu0 0
    %376 = vmatprep.subr.bf16.mxu0 0
    %377 = vmatpush1.bf16.msra.mxu0 0
    %378 = vmatprep.subr.bf16.mxu0 0
    %379 = vmatpush1.bf16.msra.mxu0 0
    %380 = vmatprep.subr.bf16.mxu0 0
    %381 = vmatpush1.bf16.msra.mxu0 0
    %382 = vmatprep.subr.bf16.mxu0 0
    %383 = vmatpush1.bf16.msra.mxu0 0
    %384 = vmatprep.subr.bf16.mxu0 0
    %385 = vmatpush1.bf16.msra.mxu0 0
    %386 = vmatprep.subr.bf16.mxu0 0
    %387 = vmatpush1.bf16.msra.mxu0 0
    %388 = vmatprep.mubr.bf16.mxu0 0
    %389 = vmatmul.mubr.bf16.gmra.mrb[0].mxu0 %v120
    %v390 = vpop.f32.mrb[0].mxu0
    %v391 = vadd.f32 0.0, %v390
    %v392 = vpop.f32.mrb[0].mxu0
    %v393 = vadd.f32 0.0, %v392
    %v394 = vpop.f32.mrb[0].mxu0
    %v395 = vadd.f32 0.0, %v394
    %v396 = vpop.f32.mrb[0].mxu0
    %v397 = vadd.f32 0.0, %v396
    %398 = vdwg.mxu0
    %s399 = scalar_lea.vmem [#allocation2], 32
    %v400 = vld [vmem:[%s399] sm:$0xff]
    %v401 = vld [vmem:[%s399 + $0x8] sm:$0xff]
    %v402 = vld [vmem:[%s399 + $0x10] sm:$0xff]
    %v403 = vld [vmem:[%s399 + $0x18] sm:$0xff]
    %v404 = vunpack.c.l.bf16 %v400
    %v405 = vunpack.c.h.bf16 %v400
    %v406 = vunpack.c.l.bf16 %v401
    %v407 = vunpack.c.h.bf16 %v401
    %v408 = vunpack.c.l.bf16 %v402
    %v409 = vunpack.c.h.bf16 %v402
    %v410 = vunpack.c.l.bf16 %v403
    %v411 = vunpack.c.h.bf16 %v403
    %v412 = vadd.f32 %v404, %v348
    %v413 = vadd.f32 %v405, %v350
    %v414 = vadd.f32 %v406, %v391
    %v415 = vadd.f32 %v407, %v393
    %v416 = vadd.f32 %v408, %v352
    %v417 = vadd.f32 %v409, %v354
    %v418 = vadd.f32 %v410, %v395
    %v419 = vadd.f32 %v411, %v397
    %v420 = vxor.u32 %v412, 2147483648
    %v421 = vxor.u32 %v413, 2147483648
    %v422 = vxor.u32 %v416, 2147483648
    %v423 = vxor.u32 %v417, 2147483648
    %v424 = vmul.f32 %v420, 1.442695
    %v425 = vpow.pop %v424
    %v426 = vmul.f32 %v421, 1.442695
    %v427 = vpow.pop %v426
    %v428 = vmul.f32 %v422, 1.442695
    %v429 = vpow.pop %v428
    %v430 = vmul.f32 %v423, 1.442695
    %v431 = vpow.pop %v430
    %v432 = vadd.f32 %v425, 1.0
    %v433 = vadd.f32 %v427, 1.0
    %v434 = vadd.f32 %v429, 1.0
    %v435 = vadd.f32 %v431, 1.0
    %v436 = vrcp.pop %v432
    %v437 = vmul.f32 1.0, %v436
    %v438 = vrcp.pop %v433
    %v439 = vmul.f32 1.0, %v438
    %v440 = vrcp.pop %v434
    %v441 = vmul.f32 1.0, %v440
    %v442 = vrcp.pop %v435
    %v443 = vmul.f32 1.0, %v442
    %v444 = vtanh.pop %v414
    %v445 = vtanh.pop %v418
    %v446 = vxor.u32 %v415, 2147483648
    %v447 = vxor.u32 %v419, 2147483648
    %v448 = vmul.f32 %v446, 1.442695
    %v449 = vpow.pop %v448
    %v450 = vmul.f32 %v447, 1.442695
    %v451 = vpow.pop %v450
    %v452 = vadd.f32 %v449, 1.0
    %v453 = vadd.f32 %v451, 1.0
    %v454 = vrcp.pop %v452
    %v455 = vmul.f32 1.0, %v454
    %v456 = vrcp.pop %v453
    %v457 = vmul.f32 1.0, %v456
    %v458 = vmul.f32 %v439, %v114
    %v459 = vmul.f32 %v443, %v115
    %v460 = vmul.f32 %v437, %v444
    %v461 = vmul.f32 %v441, %v445
    %v462 = vadd.f32 %v458, %v460
    %v463 = vadd.f32 %v459, %v461
    %v464 = vtanh.pop %v462
    %v465 = vtanh.pop %v463
    %v466 = vmul.f32 %v455, %v464
    %v467 = vmul.f32 %v457, %v465
    %v468 = vpack.c.bf16 %v467, %v466
    %469 = vmatprep.subr.bf16.mxu0 %v250
    %470 = vmatpush1.bf16.msra.mxu0 %v249
    %471 = vmatprep.subr.bf16.mxu0 %v254
    %472 = vmatpush1.bf16.msra.mxu0 %v253
    %473 = vmatprep.subr.bf16.mxu0 %v258
    %474 = vmatpush1.bf16.msra.mxu0 %v257
    %475 = vmatprep.subr.bf16.mxu0 %v262
    %476 = vmatpush1.bf16.msra.mxu0 %v261
    %477 = vmatprep.subr.bf16.mxu0 %v266
    %478 = vmatpush1.bf16.msra.mxu0 %v265
    %479 = vmatprep.subr.bf16.mxu0 %v270
    %480 = vmatpush1.bf16.msra.mxu0 %v269
    %481 = vmatprep.subr.bf16.mxu0 %v274
    %482 = vmatpush1.bf16.msra.mxu0 %v273
    %483 = vmatprep.subr.bf16.mxu0 %v278
    %484 = vmatpush1.bf16.msra.mxu0 %v277
    %485 = vmatprep.subr.bf16.mxu0 0
    %486 = vmatpush1.bf16.msra.mxu0 0
    %487 = vmatprep.subr.bf16.mxu0 0
    %488 = vmatpush1.bf16.msra.mxu0 0
    %489 = vmatprep.subr.bf16.mxu0 0
    %490 = vmatpush1.bf16.msra.mxu0 0
    %491 = vmatprep.subr.bf16.mxu0 0
    %492 = vmatpush1.bf16.msra.mxu0 0
    %493 = vmatprep.subr.bf16.mxu0 0
    %494 = vmatpush1.bf16.msra.mxu0 0
    %495 = vmatprep.subr.bf16.mxu0 0
    %496 = vmatpush1.bf16.msra.mxu0 0
    %497 = vmatprep.subr.bf16.mxu0 0
    %498 = vmatpush1.bf16.msra.mxu0 0
    %499 = vmatprep.subr.bf16.mxu0 0
    %500 = vmatpush1.bf16.msra.mxu0 0
    %501 = vmatprep.mubr.bf16.mxu0 0
    %502 = vmatmul.mubr.bf16.gmra.mrb[0].mxu0 %v468
    %v503 = vpop.f32.mrb[0].mxu0
    %v504 = vadd.f32 0.0, %v503
    %v505 = vpop.f32.mrb[0].mxu0
    %v506 = vadd.f32 0.0, %v505
    %v507 = vpop.f32.mrb[0].mxu0
    %v508 = vadd.f32 0.0, %v507
    %v509 = vpop.f32.mrb[0].mxu0
    %v510 = vadd.f32 0.0, %v509
    %511 = vdwg.mxu0
    %512 = vmatprep.subr.bf16.mxu0 %v252
    %513 = vmatpush1.bf16.msra.mxu0 %v251
    %514 = vmatprep.subr.bf16.mxu0 %v256
    %515 = vmatpush1.bf16.msra.mxu0 %v255
    %516 = vmatprep.subr.bf16.mxu0 %v260
    %517 = vmatpush1.bf16.msra.mxu0 %v259
    %518 = vmatprep.subr.bf16.mxu0 %v264
    %519 = vmatpush1.bf16.msra.mxu0 %v263
    %520 = vmatprep.subr.bf16.mxu0 %v268
    %521 = vmatpush1.bf16.msra.mxu0 %v267
    %522 = vmatprep.subr.bf16.mxu0 %v272
    %523 = vmatpush1.bf16.msra.mxu0 %v271
    %524 = vmatprep.subr.bf16.mxu0 %v276
    %525 = vmatpush1.bf16.msra.mxu0 %v275
    %526 = vmatprep.subr.bf16.mxu0 %v280
    %527 = vmatpush1.bf16.msra.mxu0 %v279
    %528 = vmatprep.subr.bf16.mxu0 0
    %529 = vmatpush1.bf16.msra.mxu0 0
    %530 = vmatprep.subr.bf16.mxu0 0
    %531 = vmatpush1.bf16.msra.mxu0 0
    %532 = vmatprep.subr.bf16.mxu0 0
    %533 = vmatpush1.bf16.msra.mxu0 0
    %534 = vmatprep.subr.bf16.mxu0 0
    %535 = vmatpush1.bf16.msra.mxu0 0
    %536 = vmatprep.subr.bf16.mxu0 0
    %537 = vmatpush1.bf16.msra.mxu0 0
    %538 = vmatprep.subr.bf16.mxu0 0
    %539 = vmatpush1.bf16.msra.mxu0 0
    %540 = vmatprep.subr.bf16.mxu0 0
    %541 = vmatpush1.bf16.msra.mxu0 0
    %542 = vmatprep.subr.bf16.mxu0 0
    %543 = vmatpush1.bf16.msra.mxu0 0
    %544 = vmatprep.mubr.bf16.mxu0 0
    %545 = vmatmul.mubr.bf16.gmra.mrb[0].mxu0 %v468
    %v546 = vpop.f32.mrb[0].mxu0
    %v547 = vadd.f32 0.0, %v546
    %v548 = vpop.f32.mrb[0].mxu0
    %v549 = vadd.f32 0.0, %v548
    %v550 = vpop.f32.mrb[0].mxu0
    %v551 = vadd.f32 0.0, %v550
    %v552 = vpop.f32.mrb[0].mxu0
    %v553 = vadd.f32 0.0, %v552
    %554 = vdwg.mxu0
    %s555 = scalar_lea.vmem [#allocation2], 64
    %v556 = vld [vmem:[%s555] sm:$0xff]
    %v557 = vld [vmem:[%s555 + $0x8] sm:$0xff]
    %v558 = vld [vmem:[%s555 + $0x10] sm:$0xff]
    %v559 = vld [vmem:[%s555 + $0x18] sm:$0xff]
    %v560 = vunpack.c.l.bf16 %v556
    %v561 = vunpack.c.h.bf16 %v556
    %v562 = vunpack.c.l.bf16 %v557
    %v563 = vunpack.c.h.bf16 %v557
    %v564 = vunpack.c.l.bf16 %v558
    %v565 = vunpack.c.h.bf16 %v558
    %v566 = vunpack.c.l.bf16 %v559
    %v567 = vunpack.c.h.bf16 %v559
    %v568 = vadd.f32 %v560, %v504
    %v569 = vadd.f32 %v561, %v506
    %v570 = vadd.f32 %v562, %v547
    %v571 = vadd.f32 %v563, %v549
    %v572 = vadd.f32 %v564, %v508
    %v573 = vadd.f32 %v565, %v510
    %v574 = vadd.f32 %v566, %v551
    %v575 = vadd.f32 %v567, %v553
    %v576 = vxor.u32 %v568, 2147483648
    %v577 = vxor.u32 %v569, 2147483648
    %v578 = vxor.u32 %v572, 2147483648
    %v579 = vxor.u32 %v573, 2147483648
    %v580 = vmul.f32 %v576, 1.442695
    %v581 = vpow.pop %v580
    %v582 = vmul.f32 %v577, 1.442695
    %v583 = vpow.pop %v582
    %v584 = vmul.f32 %v578, 1.442695
    %v585 = vpow.pop %v584
    %v586 = vmul.f32 %v579, 1.442695
    %v587 = vpow.pop %v586
    %v588 = vadd.f32 %v581, 1.0
    %v589 = vadd.f32 %v583, 1.0
    %v590 = vadd.f32 %v585, 1.0
    %v591 = vadd.f32 %v587, 1.0
    %v592 = vrcp.pop %v588
    %v593 = vmul.f32 1.0, %v592
    %v594 = vrcp.pop %v589
    %v595 = vmul.f32 1.0, %v594
    %v596 = vrcp.pop %v590
    %v597 = vmul.f32 1.0, %v596
    %v598 = vrcp.pop %v591
    %v599 = vmul.f32 1.0, %v598
    %v600 = vtanh.pop %v570
    %v601 = vtanh.pop %v574
    %v602 = vxor.u32 %v571, 2147483648
    %v603 = vxor.u32 %v575, 2147483648
    %v604 = vmul.f32 %v602, 1.442695
    %v605 = vpow.pop %v604
    %v606 = vmul.f32 %v603, 1.442695
    %v607 = vpow.pop %v606
    %v608 = vadd.f32 %v605, 1.0
    %v609 = vadd.f32 %v607, 1.0
    %v610 = vrcp.pop %v608
    %v611 = vmul.f32 1.0, %v610
    %v612 = vrcp.pop %v609
    %v613 = vmul.f32 1.0, %v612
    %v614 = vmul.f32 %v595, %v462
    %v615 = vmul.f32 %v599, %v463
    %v616 = vmul.f32 %v593, %v600
    %v617 = vmul.f32 %v597, %v601
    %v618 = vadd.f32 %v614, %v616
    %v619 = vadd.f32 %v615, %v617
    %v620 = vtanh.pop %v618
    %v621 = vtanh.pop %v619
    %v622 = vmul.f32 %v611, %v620
    %v623 = vmul.f32 %v613, %v621
    %v624 = vpack.c.bf16 %v623, %v622
    %625 = vmatprep.subr.bf16.mxu0 %v250
    %626 = vmatpush1.bf16.msra.mxu0 %v249
    %627 = vmatprep.subr.bf16.mxu0 %v254
    %628 = vmatpush1.bf16.msra.mxu0 %v253
    %629 = vmatprep.subr.bf16.mxu0 %v258
    %630 = vmatpush1.bf16.msra.mxu0 %v257
    %631 = vmatprep.subr.bf16.mxu0 %v262
    %632 = vmatpush1.bf16.msra.mxu0 %v261
    %633 = vmatprep.subr.bf16.mxu0 %v266
    %634 = vmatpush1.bf16.msra.mxu0 %v265
    %635 = vmatprep.subr.bf16.mxu0 %v270
    %636 = vmatpush1.bf16.msra.mxu0 %v269
    %637 = vmatprep.subr.bf16.mxu0 %v274
    %638 = vmatpush1.bf16.msra.mxu0 %v273
    %639 = vmatprep.subr.bf16.mxu0 %v278
    %640 = vmatpush1.bf16.msra.mxu0 %v277
    %641 = vmatprep.subr.bf16.mxu0 0
    %642 = vmatpush1.bf16.msra.mxu0 0
    %643 = vmatprep.subr.bf16.mxu0 0
    %644 = vmatpush1.bf16.msra.mxu0 0
    %645 = vmatprep.subr.bf16.mxu0 0
    %646 = vmatpush1.bf16.msra.mxu0 0
    %647 = vmatprep.subr.bf16.mxu0 0
    %648 = vmatpush1.bf16.msra.mxu0 0
    %649 = vmatprep.subr.bf16.mxu0 0
    %650 = vmatpush1.bf16.msra.mxu0 0
    %651 = vmatprep.subr.bf16.mxu0 0
    %652 = vmatpush1.bf16.msra.mxu0 0
    %653 = vmatprep.subr.bf16.mxu0 0
    %654 = vmatpush1.bf16.msra.mxu0 0
    %655 = vmatprep.subr.bf16.mxu0 0
    %656 = vmatpush1.bf16.msra.mxu0 0
    %657 = vmatprep.mubr.bf16.mxu0 0
    %658 = vmatmul.mubr.bf16.gmra.mrb[0].mxu0 %v624
    %v659 = vpop.f32.mrb[0].mxu0
    %v660 = vadd.f32 0.0, %v659
    %v661 = vpop.f32.mrb[0].mxu0
    %v662 = vadd.f32 0.0, %v661
    %v663 = vpop.f32.mrb[0].mxu0
    %v664 = vadd.f32 0.0, %v663
    %v665 = vpop.f32.mrb[0].mxu0
    %v666 = vadd.f32 0.0, %v665
    %667 = vdwg.mxu0
    %668 = vmatprep.subr.bf16.mxu0 %v252
    %669 = vmatpush1.bf16.msra.mxu0 %v251
    %670 = vmatprep.subr.bf16.mxu0 %v256
    %671 = vmatpush1.bf16.msra.mxu0 %v255
    %672 = vmatprep.subr.bf16.mxu0 %v260
    %673 = vmatpush1.bf16.msra.mxu0 %v259
    %674 = vmatprep.subr.bf16.mxu0 %v264
    %675 = vmatpush1.bf16.msra.mxu0 %v263
    %676 = vmatprep.subr.bf16.mxu0 %v268
    %677 = vmatpush1.bf16.msra.mxu0 %v267
    %678 = vmatprep.subr.bf16.mxu0 %v272
    %679 = vmatpush1.bf16.msra.mxu0 %v271
    %680 = vmatprep.subr.bf16.mxu0 %v276
    %681 = vmatpush1.bf16.msra.mxu0 %v275
    %682 = vmatprep.subr.bf16.mxu0 %v280
    %683 = vmatpush1.bf16.msra.mxu0 %v279
    %684 = vmatprep.subr.bf16.mxu0 0
    %685 = vmatpush1.bf16.msra.mxu0 0
    %686 = vmatprep.subr.bf16.mxu0 0
    %687 = vmatpush1.bf16.msra.mxu0 0
    %688 = vmatprep.subr.bf16.mxu0 0
    %689 = vmatpush1.bf16.msra.mxu0 0
    %690 = vmatprep.subr.bf16.mxu0 0
    %691 = vmatpush1.bf16.msra.mxu0 0
    %692 = vmatprep.subr.bf16.mxu0 0
    %693 = vmatpush1.bf16.msra.mxu0 0
    %694 = vmatprep.subr.bf16.mxu0 0
    %695 = vmatpush1.bf16.msra.mxu0 0
    %696 = vmatprep.subr.bf16.mxu0 0
    %697 = vmatpush1.bf16.msra.mxu0 0
    %698 = vmatprep.subr.bf16.mxu0 0
    %699 = vmatpush1.bf16.msra.mxu0 0
    %700 = vmatprep.mubr.bf16.mxu0 0
    %701 = vmatmul.mubr.bf16.gmra.mrb[0].mxu0 %v624
    %v702 = vpop.f32.mrb[0].mxu0
    %v703 = vadd.f32 0.0, %v702
    %v704 = vpop.f32.mrb[0].mxu0
    %v705 = vadd.f32 0.0, %v704
    %v706 = vpop.f32.mrb[0].mxu0
    %v707 = vadd.f32 0.0, %v706
    %v708 = vpop.f32.mrb[0].mxu0
    %v709 = vadd.f32 0.0, %v708
    %710 = vdwg.mxu0
    %s711 = scalar_lea.vmem [#allocation2], 96
    %v712 = vld [vmem:[%s711] sm:$0xff]
    %v713 = vld [vmem:[%s711 + $0x8] sm:$0xff]
    %v714 = vld [vmem:[%s711 + $0x10] sm:$0xff]
    %v715 = vld [vmem:[%s711 + $0x18] sm:$0xff]
    %v716 = vunpack.c.l.bf16 %v712
    %v717 = vunpack.c.h.bf16 %v712
    %v718 = vunpack.c.l.bf16 %v713
    %v719 = vunpack.c.h.bf16 %v713
    %v720 = vunpack.c.l.bf16 %v714
    %v721 = vunpack.c.h.bf16 %v714
    %v722 = vunpack.c.l.bf16 %v715
    %v723 = vunpack.c.h.bf16 %v715
    %v724 = vadd.f32 %v716, %v660
    %v725 = vadd.f32 %v717, %v662
    %v726 = vadd.f32 %v718, %v703
    %v727 = vadd.f32 %v719, %v705
    %v728 = vadd.f32 %v720, %v664
    %v729 = vadd.f32 %v721, %v666
    %v730 = vadd.f32 %v722, %v707
    %v731 = vadd.f32 %v723, %v709
    %v732 = vxor.u32 %v724, 2147483648
    %v733 = vxor.u32 %v725, 2147483648
    %v734 = vxor.u32 %v728, 2147483648
    %v735 = vxor.u32 %v729, 2147483648
    %v736 = vmul.f32 %v732, 1.442695
    %v737 = vpow.pop %v736
    %v738 = vmul.f32 %v733, 1.442695
    %v739 = vpow.pop %v738
    %v740 = vmul.f32 %v734, 1.442695
    %v741 = vpow.pop %v740
    %v742 = vmul.f32 %v735, 1.442695
    %v743 = vpow.pop %v742
    %v744 = vadd.f32 %v737, 1.0
    %v745 = vadd.f32 %v739, 1.0
    %v746 = vadd.f32 %v741, 1.0
    %v747 = vadd.f32 %v743, 1.0
    %v748 = vrcp.pop %v744
    %v749 = vmul.f32 1.0, %v748
    %v750 = vrcp.pop %v745
    %v751 = vmul.f32 1.0, %v750
    %v752 = vrcp.pop %v746
    %v753 = vmul.f32 1.0, %v752
    %v754 = vrcp.pop %v747
    %v755 = vmul.f32 1.0, %v754
    %v756 = vtanh.pop %v726
    %v757 = vtanh.pop %v730
    %v758 = vxor.u32 %v727, 2147483648
    %v759 = vxor.u32 %v731, 2147483648
    %v760 = vmul.f32 %v758, 1.442695
    %v761 = vpow.pop %v760
    %v762 = vmul.f32 %v759, 1.442695
    %v763 = vpow.pop %v762
    %v764 = vadd.f32 %v761, 1.0
    %v765 = vadd.f32 %v763, 1.0
    %v766 = vrcp.pop %v764
    %v767 = vmul.f32 1.0, %v766
    %v768 = vrcp.pop %v765
    %v769 = vmul.f32 1.0, %v768
    %v770 = vmul.f32 %v751, %v618
    %v771 = vmul.f32 %v755, %v619
    %v772 = vmul.f32 %v749, %v756
    %v773 = vmul.f32 %v753, %v757
    %v774 = vadd.f32 %v770, %v772
    %v775 = vadd.f32 %v771, %v773
    %v776 = vtanh.pop %v774
    %v777 = vtanh.pop %v775
    %v778 = vmul.f32 %v767, %v776
    %v779 = vmul.f32 %v769, %v777
    %v780 = vpack.c.bf16 %v779, %v778
    %781 = vmatprep.subr.bf16.mxu0 %v250
    %782 = vmatpush1.bf16.msra.mxu0 %v249
    %783 = vmatprep.subr.bf16.mxu0 %v254
    %784 = vmatpush1.bf16.msra.mxu0 %v253
    %785 = vmatprep.subr.bf16.mxu0 %v258
    %786 = vmatpush1.bf16.msra.mxu0 %v257
    %787 = vmatprep.subr.bf16.mxu0 %v262
    %788 = vmatpush1.bf16.msra.mxu0 %v261
    %789 = vmatprep.subr.bf16.mxu0 %v266
    %790 = vmatpush1.bf16.msra.mxu0 %v265
    %791 = vmatprep.subr.bf16.mxu0 %v270
    %792 = vmatpush1.bf16.msra.mxu0 %v269
    %793 = vmatprep.subr.bf16.mxu0 %v274
    %794 = vmatpush1.bf16.msra.mxu0 %v273
    %795 = vmatprep.subr.bf16.mxu0 %v278
    %796 = vmatpush1.bf16.msra.mxu0 %v277
    %797 = vmatprep.subr.bf16.mxu0 0
    %798 = vmatpush1.bf16.msra.mxu0 0
    %799 = vmatprep.subr.bf16.mxu0 0
    %800 = vmatpush1.bf16.msra.mxu0 0
    %801 = vmatprep.subr.bf16.mxu0 0
    %802 = vmatpush1.bf16.msra.mxu0 0
    %803 = vmatprep.subr.bf16.mxu0 0
    %804 = vmatpush1.bf16.msra.mxu0 0
    %805 = vmatprep.subr.bf16.mxu0 0
    %806 = vmatpush1.bf16.msra.mxu0 0
    %807 = vmatprep.subr.bf16.mxu0 0
    %808 = vmatpush1.bf16.msra.mxu0 0
    %809 = vmatprep.subr.bf16.mxu0 0
    %810 = vmatpush1.bf16.msra.mxu0 0
    %811 = vmatprep.subr.bf16.mxu0 0
    %812 = vmatpush1.bf16.msra.mxu0 0
    %813 = vmatprep.mubr.bf16.mxu0 0
    %814 = vmatmul.mubr.bf16.gmra.mrb[0].mxu0 %v780
    %v815 = vpop.f32.mrb[0].mxu0
    %v816 = vadd.f32 0.0, %v815
    %v817 = vpop.f32.mrb[0].mxu0
    %v818 = vadd.f32 0.0, %v817
    %v819 = vpop.f32.mrb[0].mxu0
    %v820 = vadd.f32 0.0, %v819
    %v821 = vpop.f32.mrb[0].mxu0
    %v822 = vadd.f32 0.0, %v821
    %823 = vdwg.mxu0
    %824 = vmatprep.subr.bf16.mxu0 %v252
    %825 = vmatpush1.bf16.msra.mxu0 %v251
    %826 = vmatprep.subr.bf16.mxu0 %v256
    %827 = vmatpush1.bf16.msra.mxu0 %v255
    %828 = vmatprep.subr.bf16.mxu0 %v260
    %829 = vmatpush1.bf16.msra.mxu0 %v259
    %830 = vmatprep.subr.bf16.mxu0 %v264
    %831 = vmatpush1.bf16.msra.mxu0 %v263
    %832 = vmatprep.subr.bf16.mxu0 %v268
    %833 = vmatpush1.bf16.msra.mxu0 %v267
    %834 = vmatprep.subr.bf16.mxu0 %v272
    %835 = vmatpush1.bf16.msra.mxu0 %v271
    %836 = vmatprep.subr.bf16.mxu0 %v276
    %837 = vmatpush1.bf16.msra.mxu0 %v275
    %838 = vmatprep.subr.bf16.mxu0 %v280
    %839 = vmatpush1.bf16.msra.mxu0 %v279
    %840 = vmatprep.subr.bf16.mxu0 0
    %841 = vmatpush1.bf16.msra.mxu0 0
    %842 = vmatprep.subr.bf16.mxu0 0
    %843 = vmatpush1.bf16.msra.mxu0 0
    %844 = vmatprep.subr.bf16.mxu0 0
    %845 = vmatpush1.bf16.msra.mxu0 0
    %846 = vmatprep.subr.bf16.mxu0 0
    %847 = vmatpush1.bf16.msra.mxu0 0
    %848 = vmatprep.subr.bf16.mxu0 0
    %849 = vmatpush1.bf16.msra.mxu0 0
    %850 = vmatprep.subr.bf16.mxu0 0
    %851 = vmatpush1.bf16.msra.mxu0 0
    %852 = vmatprep.subr.bf16.mxu0 0
    %853 = vmatpush1.bf16.msra.mxu0 0
    %854 = vmatprep.subr.bf16.mxu0 0
    %855 = vmatpush1.bf16.msra.mxu0 0
    %856 = vmatprep.mubr.bf16.mxu0 0
    %857 = vmatmul.mubr.bf16.gmra.mrb[0].mxu0 %v780
    %v858 = vpop.f32.mrb[0].mxu0
    %v859 = vadd.f32 0.0, %v858
    %v860 = vpop.f32.mrb[0].mxu0
    %v861 = vadd.f32 0.0, %v860
    %v862 = vpop.f32.mrb[0].mxu0
    %v863 = vadd.f32 0.0, %v862
    %v864 = vpop.f32.mrb[0].mxu0
    %v865 = vadd.f32 0.0, %v864
    %866 = vdwg.mxu0
    %s867 = scalar_lea.vmem [#allocation2], 128
    %v868 = vld [vmem:[%s867] sm:$0xff]
    %v869 = vld [vmem:[%s867 + $0x8] sm:$0xff]
    %v870 = vld [vmem:[%s867 + $0x10] sm:$0xff]
    %v871 = vld [vmem:[%s867 + $0x18] sm:$0xff]
    %v872 = vunpack.c.l.bf16 %v868
    %v873 = vunpack.c.h.bf16 %v868
    %v874 = vunpack.c.l.bf16 %v869
    %v875 = vunpack.c.h.bf16 %v869
    %v876 = vunpack.c.l.bf16 %v870
    %v877 = vunpack.c.h.bf16 %v870
    %v878 = vunpack.c.l.bf16 %v871
    %v879 = vunpack.c.h.bf16 %v871
    %v880 = vadd.f32 %v872, %v816
    %v881 = vadd.f32 %v873, %v818
    %v882 = vadd.f32 %v874, %v859
    %v883 = vadd.f32 %v875, %v861
    %v884 = vadd.f32 %v876, %v820
    %v885 = vadd.f32 %v877, %v822
    %v886 = vadd.f32 %v878, %v863
    %v887 = vadd.f32 %v879, %v865
    %v888 = vxor.u32 %v880, 2147483648
    %v889 = vxor.u32 %v881, 2147483648
    %v890 = vxor.u32 %v884, 2147483648
    %v891 = vxor.u32 %v885, 2147483648
    %v892 = vmul.f32 %v888, 1.442695
    %v893 = vpow.pop %v892
    %v894 = vmul.f32 %v889, 1.442695
    %v895 = vpow.pop %v894
    %v896 = vmul.f32 %v890, 1.442695
    %v897 = vpow.pop %v896
    %v898 = vmul.f32 %v891, 1.442695
    %v899 = vpow.pop %v898
    %v900 = vadd.f32 %v893, 1.0
    %v901 = vadd.f32 %v895, 1.0
    %v902 = vadd.f32 %v897, 1.0
    %v903 = vadd.f32 %v899, 1.0
    %v904 = vrcp.pop %v900
    %v905 = vmul.f32 1.0, %v904
    %v906 = vrcp.pop %v901
    %v907 = vmul.f32 1.0, %v906
    %v908 = vrcp.pop %v902
    %v909 = vmul.f32 1.0, %v908
    %v910 = vrcp.pop %v903
    %v911 = vmul.f32 1.0, %v910
    %v912 = vtanh.pop %v882
    %v913 = vtanh.pop %v886
    %v914 = vxor.u32 %v883, 2147483648
    %v915 = vxor.u32 %v887, 2147483648
    %v916 = vmul.f32 %v914, 1.442695
    %v917 = vpow.pop %v916
    %v918 = vmul.f32 %v915, 1.442695
    %v919 = vpow.pop %v918
    %v920 = vadd.f32 %v917, 1.0
    %v921 = vadd.f32 %v919, 1.0
    %v922 = vrcp.pop %v920
    %v923 = vmul.f32 1.0, %v922
    %v924 = vrcp.pop %v921
    %v925 = vmul.f32 1.0, %v924
    %v926 = vmul.f32 %v907, %v774
    %v927 = vmul.f32 %v911, %v775
    %v928 = vmul.f32 %v905, %v912
    %v929 = vmul.f32 %v909, %v913
    %v930 = vadd.f32 %v926, %v928
    %v931 = vadd.f32 %v927, %v929
    %v932 = vtanh.pop %v930
    %v933 = vtanh.pop %v931
    %v934 = vmul.f32 %v923, %v932
    %v935 = vmul.f32 %v925, %v933
    %v936 = vpack.c.bf16 %v935, %v934
    %937 = vmatprep.subr.bf16.mxu0 %v250
    %938 = vmatpush1.bf16.msra.mxu0 %v249
    %939 = vmatprep.subr.bf16.mxu0 %v254
    %940 = vmatpush1.bf16.msra.mxu0 %v253
    %941 = vmatprep.subr.bf16.mxu0 %v258
    %942 = vmatpush1.bf16.msra.mxu0 %v257
    %943 = vmatprep.subr.bf16.mxu0 %v262
    %944 = vmatpush1.bf16.msra.mxu0 %v261
    %945 = vmatprep.subr.bf16.mxu0 %v266
    %946 = vmatpush1.bf16.msra.mxu0 %v265
    %947 = vmatprep.subr.bf16.mxu0 %v270
    %948 = vmatpush1.bf16.msra.mxu0 %v269
    %949 = vmatprep.subr.bf16.mxu0 %v274
    %950 = vmatpush1.bf16.msra.mxu0 %v273
    %951 = vmatprep.subr.bf16.mxu0 %v278
    %952 = vmatpush1.bf16.msra.mxu0 %v277
    %953 = vmatprep.subr.bf16.mxu0 0
    %954 = vmatpush1.bf16.msra.mxu0 0
    %955 = vmatprep.subr.bf16.mxu0 0
    %956 = vmatpush1.bf16.msra.mxu0 0
    %957 = vmatprep.subr.bf16.mxu0 0
    %958 = vmatpush1.bf16.msra.mxu0 0
    %959 = vmatprep.subr.bf16.mxu0 0
    %960 = vmatpush1.bf16.msra.mxu0 0
    %961 = vmatprep.subr.bf16.mxu0 0
    %962 = vmatpush1.bf16.msra.mxu0 0
    %963 = vmatprep.subr.bf16.mxu0 0
    %964 = vmatpush1.bf16.msra.mxu0 0
    %965 = vmatprep.subr.bf16.mxu0 0
    %966 = vmatpush1.bf16.msra.mxu0 0
    %967 = vmatprep.subr.bf16.mxu0 0
    %968 = vmatpush1.bf16.msra.mxu0 0
    %969 = vmatprep.mubr.bf16.mxu0 0
    %970 = vmatmul.mubr.bf16.gmra.mrb[0].mxu0 %v936
    %v971 = vpop.f32.mrb[0].mxu0
    %v972 = vadd.f32 0.0, %v971
    %v973 = vpop.f32.mrb[0].mxu0
    %v974 = vadd.f32 0.0, %v973
    %v975 = vpop.f32.mrb[0].mxu0
    %v976 = vadd.f32 0.0, %v975
    %v977 = vpop.f32.mrb[0].mxu0
    %v978 = vadd.f32 0.0, %v977
    %979 = vdwg.mxu0
    %980 = vmatprep.subr.bf16.mxu0 %v252
    %981 = vmatpush1.bf16.msra.mxu0 %v251
    %982 = vmatprep.subr.bf16.mxu0 %v256
    %983 = vmatpush1.bf16.msra.mxu0 %v255
    %984 = vmatprep.subr.bf16.mxu0 %v260
    %985 = vmatpush1.bf16.msra.mxu0 %v259
    %986 = vmatprep.subr.bf16.mxu0 %v264
    %987 = vmatpush1.bf16.msra.mxu0 %v263
    %988 = vmatprep.subr.bf16.mxu0 %v268
    %989 = vmatpush1.bf16.msra.mxu0 %v267
    %990 = vmatprep.subr.bf16.mxu0 %v272
    %991 = vmatpush1.bf16.msra.mxu0 %v271
    %992 = vmatprep.subr.bf16.mxu0 %v276
    %993 = vmatpush1.bf16.msra.mxu0 %v275
    %994 = vmatprep.subr.bf16.mxu0 %v280
    %995 = vmatpush1.bf16.msra.mxu0 %v279
    %996 = vmatprep.subr.bf16.mxu0 0
    %997 = vmatpush1.bf16.msra.mxu0 0
    %998 = vmatprep.subr.bf16.mxu0 0
    %999 = vmatpush1.bf16.msra.mxu0 0
    %1000 = vmatprep.subr.bf16.mxu0 0
    %1001 = vmatpush1.bf16.msra.mxu0 0
    %1002 = vmatprep.subr.bf16.mxu0 0
    %1003 = vmatpush1.bf16.msra.mxu0 0
    %1004 = vmatprep.subr.bf16.mxu0 0
    %1005 = vmatpush1.bf16.msra.mxu0 0
    %1006 = vmatprep.subr.bf16.mxu0 0
    %1007 = vmatpush1.bf16.msra.mxu0 0
    %1008 = vmatprep.subr.bf16.mxu0 0
    %1009 = vmatpush1.bf16.msra.mxu0 0
    %1010 = vmatprep.subr.bf16.mxu0 0
    %1011 = vmatpush1.bf16.msra.mxu0 0
    %1012 = vmatprep.mubr.bf16.mxu0 0
    %1013 = vmatmul.mubr.bf16.gmra.mrb[0].mxu0 %v936
    %v1014 = vpop.f32.mrb[0].mxu0
    %v1015 = vadd.f32 0.0, %v1014
    %v1016 = vpop.f32.mrb[0].mxu0
    %v1017 = vadd.f32 0.0, %v1016
    %v1018 = vpop.f32.mrb[0].mxu0
    %v1019 = vadd.f32 0.0, %v1018
    %v1020 = vpop.f32.mrb[0].mxu0
    %v1021 = vadd.f32 0.0, %v1020
    %1022 = vdwg.mxu0
    %s1023 = scalar_lea.vmem [#allocation2], 160
    %v1024 = vld [vmem:[%s1023] sm:$0xff]
    %v1025 = vld [vmem:[%s1023 + $0x8] sm:$0xff]
    %v1026 = vld [vmem:[%s1023 + $0x10] sm:$0xff]
    %v1027 = vld [vmem:[%s1023 + $0x18] sm:$0xff]
    %v1028 = vunpack.c.l.bf16 %v1024
    %v1029 = vunpack.c.h.bf16 %v1024
    %v1030 = vunpack.c.l.bf16 %v1025
    %v1031 = vunpack.c.h.bf16 %v1025
    %v1032 = vunpack.c.l.bf16 %v1026
    %v1033 = vunpack.c.h.bf16 %v1026
    %v1034 = vunpack.c.l.bf16 %v1027
    %v1035 = vunpack.c.h.bf16 %v1027
    %v1036 = vadd.f32 %v1028, %v972
    %v1037 = vadd.f32 %v1029, %v974
    %v1038 = vadd.f32 %v1030, %v1015
    %v1039 = vadd.f32 %v1031, %v1017
    %v1040 = vadd.f32 %v1032, %v976
    %v1041 = vadd.f32 %v1033, %v978
    %v1042 = vadd.f32 %v1034, %v1019
    %v1043 = vadd.f32 %v1035, %v1021
    %v1044 = vxor.u32 %v1036, 2147483648
    %v1045 = vxor.u32 %v1037, 2147483648
    %v1046 = vxor.u32 %v1040, 2147483648
    %v1047 = vxor.u32 %v1041, 2147483648
    %v1048 = vmul.f32 %v1044, 1.442695
    %v1049 = vpow.pop %v1048
    %v1050 = vmul.f32 %v1045, 1.442695
    %v1051 = vpow.pop %v1050
    %v1052 = vmul.f32 %v1046, 1.442695
    %v1053 = vpow.pop %v1052
    %v1054 = vmul.f32 %v1047, 1.442695
    %v1055 = vpow.pop %v1054
    %v1056 = vadd.f32 %v1049, 1.0
    %v1057 = vadd.f32 %v1051, 1.0
    %v1058 = vadd.f32 %v1053, 1.0
    %v1059 = vadd.f32 %v1055, 1.0
    %v1060 = vrcp.pop %v1056
    %v1061 = vmul.f32 1.0, %v1060
    %v1062 = vrcp.pop %v1057
    %v1063 = vmul.f32 1.0, %v1062
    %v1064 = vrcp.pop %v1058
    %v1065 = vmul.f32 1.0, %v1064
    %v1066 = vrcp.pop %v1059
    %v1067 = vmul.f32 1.0, %v1066
    %v1068 = vtanh.pop %v1038
    %v1069 = vtanh.pop %v1042
    %v1070 = vxor.u32 %v1039, 2147483648
    %v1071 = vxor.u32 %v1043, 2147483648
    %v1072 = vmul.f32 %v1070, 1.442695
    %v1073 = vpow.pop %v1072
    %v1074 = vmul.f32 %v1071, 1.442695
    %v1075 = vpow.pop %v1074
    %v1076 = vadd.f32 %v1073, 1.0
    %v1077 = vadd.f32 %v1075, 1.0
    %v1078 = vrcp.pop %v1076
    %v1079 = vmul.f32 1.0, %v1078
    %v1080 = vrcp.pop %v1077
    %v1081 = vmul.f32 1.0, %v1080
    %v1082 = vmul.f32 %v1063, %v930
    %v1083 = vmul.f32 %v1067, %v931
    %v1084 = vmul.f32 %v1061, %v1068
    %v1085 = vmul.f32 %v1065, %v1069
    %v1086 = vadd.f32 %v1082, %v1084
    %v1087 = vadd.f32 %v1083, %v1085
    %v1088 = vtanh.pop %v1086
    %v1089 = vtanh.pop %v1087
    %v1090 = vmul.f32 %v1079, %v1088
    %v1091 = vmul.f32 %v1081, %v1089
    %v1092 = vpack.c.bf16 %v1091, %v1090
    %1093 = vmatprep.subr.bf16.mxu0 %v250
    %1094 = vmatpush1.bf16.msra.mxu0 %v249
    %1095 = vmatprep.subr.bf16.mxu0 %v254
    %1096 = vmatpush1.bf16.msra.mxu0 %v253
    %1097 = vmatprep.subr.bf16.mxu0 %v258
    %1098 = vmatpush1.bf16.msra.mxu0 %v257
    %1099 = vmatprep.subr.bf16.mxu0 %v262
    %1100 = vmatpush1.bf16.msra.mxu0 %v261
    %1101 = vmatprep.subr.bf16.mxu0 %v266
    %1102 = vmatpush1.bf16.msra.mxu0 %v265
    %1103 = vmatprep.subr.bf16.mxu0 %v270
    %1104 = vmatpush1.bf16.msra.mxu0 %v269
    %1105 = vmatprep.subr.bf16.mxu0 %v274
    %1106 = vmatpush1.bf16.msra.mxu0 %v273
    %1107 = vmatprep.subr.bf16.mxu0 %v278
    %1108 = vmatpush1.bf16.msra.mxu0 %v277
    %1109 = vmatprep.subr.bf16.mxu0 0
    %1110 = vmatpush1.bf16.msra.mxu0 0
    %1111 = vmatprep.subr.bf16.mxu0 0
    %1112 = vmatpush1.bf16.msra.mxu0 0
    %1113 = vmatprep.subr.bf16.mxu0 0
    %1114 = vmatpush1.bf16.msra.mxu0 0
    %1115 = vmatprep.subr.bf16.mxu0 0
    %1116 = vmatpush1.bf16.msra.mxu0 0
    %1117 = vmatprep.subr.bf16.mxu0 0
    %1118 = vmatpush1.bf16.msra.mxu0 0
    %1119 = vmatprep.subr.bf16.mxu0 0
    %1120 = vmatpush1.bf16.msra.mxu0 0
    %1121 = vmatprep.subr.bf16.mxu0 0
    %1122 = vmatpush1.bf16.msra.mxu0 0
    %1123 = vmatprep.subr.bf16.mxu0 0
    %1124 = vmatpush1.bf16.msra.mxu0 0
    %1125 = vmatprep.mubr.bf16.mxu0 0
    %1126 = vmatmul.mubr.bf16.gmra.mrb[0].mxu0 %v1092
    %v1127 = vpop.f32.mrb[0].mxu0
    %v1128 = vadd.f32 0.0, %v1127
    %v1129 = vpop.f32.mrb[0].mxu0
    %v1130 = vadd.f32 0.0, %v1129
    %v1131 = vpop.f32.mrb[0].mxu0
    %v1132 = vadd.f32 0.0, %v1131
    %v1133 = vpop.f32.mrb[0].mxu0
    %v1134 = vadd.f32 0.0, %v1133
    %1135 = vdwg.mxu0
    %1136 = vmatprep.subr.bf16.mxu0 %v252
    %1137 = vmatpush1.bf16.msra.mxu0 %v251
    %1138 = vmatprep.subr.bf16.mxu0 %v256
    %1139 = vmatpush1.bf16.msra.mxu0 %v255
    %1140 = vmatprep.subr.bf16.mxu0 %v260
    %1141 = vmatpush1.bf16.msra.mxu0 %v259
    %1142 = vmatprep.subr.bf16.mxu0 %v264
    %1143 = vmatpush1.bf16.msra.mxu0 %v263
    %1144 = vmatprep.subr.bf16.mxu0 %v268
    %1145 = vmatpush1.bf16.msra.mxu0 %v267
    %1146 = vmatprep.subr.bf16.mxu0 %v272
    %1147 = vmatpush1.bf16.msra.mxu0 %v271
    %1148 = vmatprep.subr.bf16.mxu0 %v276
    %1149 = vmatpush1.bf16.msra.mxu0 %v275
    %1150 = vmatprep.subr.bf16.mxu0 %v280
    %1151 = vmatpush1.bf16.msra.mxu0 %v279
    %1152 = vmatprep.subr.bf16.mxu0 0
    %1153 = vmatpush1.bf16.msra.mxu0 0
    %1154 = vmatprep.subr.bf16.mxu0 0
    %1155 = vmatpush1.bf16.msra.mxu0 0
    %1156 = vmatprep.subr.bf16.mxu0 0
    %1157 = vmatpush1.bf16.msra.mxu0 0
    %1158 = vmatprep.subr.bf16.mxu0 0
    %1159 = vmatpush1.bf16.msra.mxu0 0
    %1160 = vmatprep.subr.bf16.mxu0 0
    %1161 = vmatpush1.bf16.msra.mxu0 0
    %1162 = vmatprep.subr.bf16.mxu0 0
    %1163 = vmatpush1.bf16.msra.mxu0 0
    %1164 = vmatprep.subr.bf16.mxu0 0
    %1165 = vmatpush1.bf16.msra.mxu0 0
    %1166 = vmatprep.subr.bf16.mxu0 0
    %1167 = vmatpush1.bf16.msra.mxu0 0
    %1168 = vmatprep.mubr.bf16.mxu0 0
    %1169 = vmatmul.mubr.bf16.gmra.mrb[0].mxu0 %v1092
    %v1170 = vpop.f32.mrb[0].mxu0
    %v1171 = vadd.f32 0.0, %v1170
    %v1172 = vpop.f32.mrb[0].mxu0
    %v1173 = vadd.f32 0.0, %v1172
    %v1174 = vpop.f32.mrb[0].mxu0
    %v1175 = vadd.f32 0.0, %v1174
    %v1176 = vpop.f32.mrb[0].mxu0
    %v1177 = vadd.f32 0.0, %v1176
    %1178 = vdwg.mxu0
    %s1179 = scalar_lea.vmem [#allocation2], 192
    %v1180 = vld [vmem:[%s1179] sm:$0xff]
    %v1181 = vld [vmem:[%s1179 + $0x8] sm:$0xff]
    %v1182 = vld [vmem:[%s1179 + $0x10] sm:$0xff]
    %v1183 = vld [vmem:[%s1179 + $0x18] sm:$0xff]
    %v1184 = vunpack.c.l.bf16 %v1180
    %v1185 = vunpack.c.h.bf16 %v1180
    %v1186 = vunpack.c.l.bf16 %v1181
    %v1187 = vunpack.c.h.bf16 %v1181
    %v1188 = vunpack.c.l.bf16 %v1182
    %v1189 = vunpack.c.h.bf16 %v1182
    %v1190 = vunpack.c.l.bf16 %v1183
    %v1191 = vunpack.c.h.bf16 %v1183
    %v1192 = vadd.f32 %v1184, %v1128
    %v1193 = vadd.f32 %v1185, %v1130
    %v1194 = vadd.f32 %v1186, %v1171
    %v1195 = vadd.f32 %v1187, %v1173
    %v1196 = vadd.f32 %v1188, %v1132
    %v1197 = vadd.f32 %v1189, %v1134
    %v1198 = vadd.f32 %v1190, %v1175
    %v1199 = vadd.f32 %v1191, %v1177
    %v1200 = vxor.u32 %v1192, 2147483648
    %v1201 = vxor.u32 %v1193, 2147483648
    %v1202 = vxor.u32 %v1196, 2147483648
    %v1203 = vxor.u32 %v1197, 2147483648
    %v1204 = vmul.f32 %v1200, 1.442695
    %v1205 = vpow.pop %v1204
    %v1206 = vmul.f32 %v1201, 1.442695
    %v1207 = vpow.pop %v1206
    %v1208 = vmul.f32 %v1202, 1.442695
    %v1209 = vpow.pop %v1208
    %v1210 = vmul.f32 %v1203, 1.442695
    %v1211 = vpow.pop %v1210
    %v1212 = vadd.f32 %v1205, 1.0
    %v1213 = vadd.f32 %v1207, 1.0
    %v1214 = vadd.f32 %v1209, 1.0
    %v1215 = vadd.f32 %v1211, 1.0
    %v1216 = vrcp.pop %v1212
    %v1217 = vmul.f32 1.0, %v1216
    %v1218 = vrcp.pop %v1213
    %v1219 = vmul.f32 1.0, %v1218
    %v1220 = vrcp.pop %v1214
    %v1221 = vmul.f32 1.0, %v1220
    %v1222 = vrcp.pop %v1215
    %v1223 = vmul.f32 1.0, %v1222
    %v1224 = vtanh.pop %v1194
    %v1225 = vtanh.pop %v1198
    %v1226 = vxor.u32 %v1195, 2147483648
    %v1227 = vxor.u32 %v1199, 2147483648
    %v1228 = vmul.f32 %v1226, 1.442695
    %v1229 = vpow.pop %v1228
    %v1230 = vmul.f32 %v1227, 1.442695
    %v1231 = vpow.pop %v1230
    %v1232 = vadd.f32 %v1229, 1.0
    %v1233 = vadd.f32 %v1231, 1.0
    %v1234 = vrcp.pop %v1232
    %v1235 = vmul.f32 1.0, %v1234
    %v1236 = vrcp.pop %v1233
    %v1237 = vmul.f32 1.0, %v1236
    %v1238 = vmul.f32 %v1219, %v1086
    %v1239 = vmul.f32 %v1223, %v1087
    %v1240 = vmul.f32 %v1217, %v1224
    %v1241 = vmul.f32 %v1221, %v1225
    %v1242 = vadd.f32 %v1238, %v1240
    %v1243 = vadd.f32 %v1239, %v1241
    %v1244 = vtanh.pop %v1242
    %v1245 = vtanh.pop %v1243
    %v1246 = vmul.f32 %v1235, %v1244
    %v1247 = vmul.f32 %v1237, %v1245
    %v1248 = vpack.c.bf16 %v1247, %v1246
    %1249 = vmatprep.subr.bf16.mxu0 %v250
    %1250 = vmatpush1.bf16.msra.mxu0 %v249
    %1251 = vmatprep.subr.bf16.mxu0 %v254
    %1252 = vmatpush1.bf16.msra.mxu0 %v253
    %1253 = vmatprep.subr.bf16.mxu0 %v258
    %1254 = vmatpush1.bf16.msra.mxu0 %v257
    %1255 = vmatprep.subr.bf16.mxu0 %v262
    %1256 = vmatpush1.bf16.msra.mxu0 %v261
    %1257 = vmatprep.subr.bf16.mxu0 %v266
    %1258 = vmatpush1.bf16.msra.mxu0 %v265
    %1259 = vmatprep.subr.bf16.mxu0 %v270
    %1260 = vmatpush1.bf16.msra.mxu0 %v269
    %1261 = vmatprep.subr.bf16.mxu0 %v274
    %1262 = vmatpush1.bf16.msra.mxu0 %v273
    %1263 = vmatprep.subr.bf16.mxu0 %v278
    %1264 = vmatpush1.bf16.msra.mxu0 %v277
    %1265 = vmatprep.subr.bf16.mxu0 0
    %1266 = vmatpush1.bf16.msra.mxu0 0
    %1267 = vmatprep.subr.bf16.mxu0 0
    %1268 = vmatpush1.bf16.msra.mxu0 0
    %1269 = vmatprep.subr.bf16.mxu0 0
    %1270 = vmatpush1.bf16.msra.mxu0 0
    %1271 = vmatprep.subr.bf16.mxu0 0
    %1272 = vmatpush1.bf16.msra.mxu0 0
    %1273 = vmatprep.subr.bf16.mxu0 0
    %1274 = vmatpush1.bf16.msra.mxu0 0
    %1275 = vmatprep.subr.bf16.mxu0 0
    %1276 = vmatpush1.bf16.msra.mxu0 0
    %1277 = vmatprep.subr.bf16.mxu0 0
    %1278 = vmatpush1.bf16.msra.mxu0 0
    %1279 = vmatprep.subr.bf16.mxu0 0
    %1280 = vmatpush1.bf16.msra.mxu0 0
    %1281 = vmatprep.mubr.bf16.mxu0 0
    %1282 = vmatmul.mubr.bf16.gmra.mrb[0].mxu0 %v1248
    %v1283 = vpop.f32.mrb[0].mxu0
    %v1284 = vadd.f32 0.0, %v1283
    %v1285 = vpop.f32.mrb[0].mxu0
    %v1286 = vadd.f32 0.0, %v1285
    %v1287 = vpop.f32.mrb[0].mxu0
    %v1288 = vadd.f32 0.0, %v1287
    %v1289 = vpop.f32.mrb[0].mxu0
    %v1290 = vadd.f32 0.0, %v1289
    %1291 = vdwg.mxu0
    %1292 = vmatprep.subr.bf16.mxu0 %v252
    %1293 = vmatpush1.bf16.msra.mxu0 %v251
    %1294 = vmatprep.subr.bf16.mxu0 %v256
    %1295 = vmatpush1.bf16.msra.mxu0 %v255
    %1296 = vmatprep.subr.bf16.mxu0 %v260
    %1297 = vmatpush1.bf16.msra.mxu0 %v259
    %1298 = vmatprep.subr.bf16.mxu0 %v264
    %1299 = vmatpush1.bf16.msra.mxu0 %v263
    %1300 = vmatprep.subr.bf16.mxu0 %v268
    %1301 = vmatpush1.bf16.msra.mxu0 %v267
    %1302 = vmatprep.subr.bf16.mxu0 %v272
    %1303 = vmatpush1.bf16.msra.mxu0 %v271
    %1304 = vmatprep.subr.bf16.mxu0 %v276
    %1305 = vmatpush1.bf16.msra.mxu0 %v275
    %1306 = vmatprep.subr.bf16.mxu0 %v280
    %1307 = vmatpush1.bf16.msra.mxu0 %v279
    %1308 = vmatprep.subr.bf16.mxu0 0
    %1309 = vmatpush1.bf16.msra.mxu0 0
    %1310 = vmatprep.subr.bf16.mxu0 0
    %1311 = vmatpush1.bf16.msra.mxu0 0
    %1312 = vmatprep.subr.bf16.mxu0 0
    %1313 = vmatpush1.bf16.msra.mxu0 0
    %1314 = vmatprep.subr.bf16.mxu0 0
    %1315 = vmatpush1.bf16.msra.mxu0 0
    %1316 = vmatprep.subr.bf16.mxu0 0
    %1317 = vmatpush1.bf16.msra.mxu0 0
    %1318 = vmatprep.subr.bf16.mxu0 0
    %1319 = vmatpush1.bf16.msra.mxu0 0
    %1320 = vmatprep.subr.bf16.mxu0 0
    %1321 = vmatpush1.bf16.msra.mxu0 0
    %1322 = vmatprep.subr.bf16.mxu0 0
    %1323 = vmatpush1.bf16.msra.mxu0 0
    %1324 = vmatprep.mubr.bf16.mxu0 0
    %1325 = vmatmul.mubr.bf16.gmra.mrb[0].mxu0 %v1248
    %v1326 = vpop.f32.mrb[0].mxu0
    %v1327 = vadd.f32 0.0, %v1326
    %v1328 = vpop.f32.mrb[0].mxu0
    %v1329 = vadd.f32 0.0, %v1328
    %v1330 = vpop.f32.mrb[0].mxu0
    %v1331 = vadd.f32 0.0, %v1330
    %v1332 = vpop.f32.mrb[0].mxu0
    %v1333 = vadd.f32 0.0, %v1332
    %1334 = vdwg.mxu0
    %s1335 = scalar_lea.vmem [#allocation2], 224
    %v1336 = vld [vmem:[%s1335] sm:$0xff]
    %v1337 = vld [vmem:[%s1335 + $0x8] sm:$0xff]
    %v1338 = vld [vmem:[%s1335 + $0x10] sm:$0xff]
    %v1339 = vld [vmem:[%s1335 + $0x18] sm:$0xff]
    %v1340 = vunpack.c.l.bf16 %v1336
    %v1341 = vunpack.c.h.bf16 %v1336
    %v1342 = vunpack.c.l.bf16 %v1337
    %v1343 = vunpack.c.h.bf16 %v1337
    %v1344 = vunpack.c.l.bf16 %v1338
    %v1345 = vunpack.c.h.bf16 %v1338
    %v1346 = vunpack.c.l.bf16 %v1339
    %v1347 = vunpack.c.h.bf16 %v1339
    %v1348 = vadd.f32 %v1340, %v1284
    %v1349 = vadd.f32 %v1341, %v1286
    %v1350 = vadd.f32 %v1342, %v1327
    %v1351 = vadd.f32 %v1343, %v1329
    %v1352 = vadd.f32 %v1344, %v1288
    %v1353 = vadd.f32 %v1345, %v1290
    %v1354 = vadd.f32 %v1346, %v1331
    %v1355 = vadd.f32 %v1347, %v1333
    %v1356 = vxor.u32 %v1348, 2147483648
    %v1357 = vxor.u32 %v1349, 2147483648
    %v1358 = vxor.u32 %v1352, 2147483648
    %v1359 = vxor.u32 %v1353, 2147483648
    %v1360 = vmul.f32 %v1356, 1.442695
    %v1361 = vpow.pop %v1360
    %v1362 = vmul.f32 %v1357, 1.442695
    %v1363 = vpow.pop %v1362
    %v1364 = vmul.f32 %v1358, 1.442695
    %v1365 = vpow.pop %v1364
    %v1366 = vmul.f32 %v1359, 1.442695
    %v1367 = vpow.pop %v1366
    %v1368 = vadd.f32 %v1361, 1.0
    %v1369 = vadd.f32 %v1363, 1.0
    %v1370 = vadd.f32 %v1365, 1.0
    %v1371 = vadd.f32 %v1367, 1.0
    %v1372 = vrcp.pop %v1368
    %v1373 = vmul.f32 1.0, %v1372
    %v1374 = vrcp.pop %v1369
    %v1375 = vmul.f32 1.0, %v1374
    %v1376 = vrcp.pop %v1370
    %v1377 = vmul.f32 1.0, %v1376
    %v1378 = vrcp.pop %v1371
    %v1379 = vmul.f32 1.0, %v1378
    %v1380 = vtanh.pop %v1350
    %v1381 = vtanh.pop %v1354
    %v1382 = vxor.u32 %v1351, 2147483648
    %v1383 = vxor.u32 %v1355, 2147483648
    %v1384 = vmul.f32 %v1382, 1.442695
    %v1385 = vpow.pop %v1384
    %v1386 = vmul.f32 %v1383, 1.442695
    %v1387 = vpow.pop %v1386
    %v1388 = vadd.f32 %v1385, 1.0
    %v1389 = vadd.f32 %v1387, 1.0
    %v1390 = vrcp.pop %v1388
    %v1391 = vmul.f32 1.0, %v1390
    %v1392 = vrcp.pop %v1389
    %v1393 = vmul.f32 1.0, %v1392
    %v1394 = vmul.f32 %v1375, %v1242
    %v1395 = vmul.f32 %v1379, %v1243
    %v1396 = vmul.f32 %v1373, %v1380
    %v1397 = vmul.f32 %v1377, %v1381
    %v1398 = vadd.f32 %v1394, %v1396
    %v1399 = vadd.f32 %v1395, %v1397
    %v1400 = vtanh.pop %v1398
    %v1401 = vtanh.pop %v1399
    %v1402 = vmul.f32 %v1391, %v1400
    %v1403 = vmul.f32 %v1393, %v1401
    %v1404 = vpack.c.bf16 %v1403, %v1402
    %v1405 = vld [vmem:[#allocation7] sm:$0xf]
    %v1406 = vld [vmem:[#allocation7 + $0x4] sm:$0xf]
    %v1407 = vld [vmem:[#allocation7 + $0x8] sm:$0xf]
    %v1408 = vld [vmem:[#allocation7 + $0xc] sm:$0xf]
    %v1409 = vld [vmem:[#allocation7 + $0x10] sm:$0xf]
    %v1410 = vld [vmem:[#allocation7 + $0x14] sm:$0xf]
    %v1411 = vld [vmem:[#allocation7 + $0x18] sm:$0xf]
    %v1412 = vld [vmem:[#allocation7 + $0x1c] sm:$0xf]
    %v1413 = vld [vmem:[#allocation7 + $0x20] sm:$0xf]
    %v1414 = vld [vmem:[#allocation7 + $0x24] sm:$0xf]
    %v1415 = vld [vmem:[#allocation7 + $0x28] sm:$0xf]
    %v1416 = vld [vmem:[#allocation7 + $0x2c] sm:$0xf]
    %v1417 = vld [vmem:[#allocation7 + $0x30] sm:$0xf]
    %v1418 = vld [vmem:[#allocation7 + $0x34] sm:$0xf]
    %v1419 = vld [vmem:[#allocation7 + $0x38] sm:$0xf]
    %v1420 = vld [vmem:[#allocation7 + $0x3c] sm:$0xf]
    %v1421 = vld [vmem:[%s3] sm:$0x1]
    %v1423 = vlaneseq
    %v1424 = vshrl.u32 %v1423, 7
    %v1425 = vsub.s32 0, %v1424
    %v1426 = vrot.slane %v1421, %v1425
    %v1444 = vunpack.c.l.b16 %v1405
    %v1445 = vunpack.c.l.b16 %v1406
    %v1446 = vunpack.c.l.b16 %v1407
    %v1447 = vunpack.c.l.b16 %v1408
    %v1448 = vunpack.c.l.b16 %v1409
    %v1449 = vunpack.c.l.b16 %v1410
    %v1450 = vunpack.c.l.b16 %v1411
    %v1451 = vunpack.c.l.b16 %v1412
    %v1452 = vunpack.c.l.b16 %v1413
    %v1453 = vunpack.c.l.b16 %v1414
    %v1454 = vunpack.c.l.b16 %v1415
    %v1455 = vunpack.c.l.b16 %v1416
    %v1456 = vunpack.c.l.b16 %v1417
    %v1457 = vunpack.c.l.b16 %v1418
    %v1458 = vunpack.c.l.b16 %v1419
    %v1459 = vunpack.c.l.b16 %v1420
    %v1460 = vpack.c.b16 %v1445, %v1444
    %v1461 = vpack.c.b16 %v1447, %v1446
    %v1462 = vpack.c.b16 %v1449, %v1448
    %v1463 = vpack.c.b16 %v1451, %v1450
    %v1464 = vpack.c.b16 %v1453, %v1452
    %v1465 = vpack.c.b16 %v1455, %v1454
    %v1466 = vpack.c.b16 %v1457, %v1456
    %v1467 = vpack.c.b16 %v1459, %v1458
    %1476 = vmatprep.subr.bf16.mxu0 0
    %1477 = vmatpush1.bf16.msra.mxu0 %v1460
    %1478 = vmatprep.subr.bf16.mxu0 0
    %1479 = vmatpush1.bf16.msra.mxu0 %v1461
    %1480 = vmatprep.subr.bf16.mxu0 0
    %1481 = vmatpush1.bf16.msra.mxu0 %v1462
    %1482 = vmatprep.subr.bf16.mxu0 0
    %1483 = vmatpush1.bf16.msra.mxu0 %v1463
    %1484 = vmatprep.subr.bf16.mxu0 0
    %1485 = vmatpush1.bf16.msra.mxu0 %v1464
    %1486 = vmatprep.subr.bf16.mxu0 0
    %1487 = vmatpush1.bf16.msra.mxu0 %v1465
    %1488 = vmatprep.subr.bf16.mxu0 0
    %1489 = vmatpush1.bf16.msra.mxu0 %v1466
    %1490 = vmatprep.subr.bf16.mxu0 0
    %1491 = vmatpush1.bf16.msra.mxu0 %v1467
    %1492 = vmatprep.subr.bf16.mxu0 0
    %1493 = vmatpush1.bf16.msra.mxu0 0
    %1494 = vmatprep.subr.bf16.mxu0 0
    %1495 = vmatpush1.bf16.msra.mxu0 0
    %1496 = vmatprep.subr.bf16.mxu0 0
    %1497 = vmatpush1.bf16.msra.mxu0 0
    %1498 = vmatprep.subr.bf16.mxu0 0
    %1499 = vmatpush1.bf16.msra.mxu0 0
    %1500 = vmatprep.subr.bf16.mxu0 0
    %1501 = vmatpush1.bf16.msra.mxu0 0
    %1502 = vmatprep.subr.bf16.mxu0 0
    %1503 = vmatpush1.bf16.msra.mxu0 0
    %1504 = vmatprep.subr.bf16.mxu0 0
    %1505 = vmatpush1.bf16.msra.mxu0 0
    %1506 = vmatprep.subr.bf16.mxu0 0
    %1507 = vmatpush1.bf16.msra.mxu0 0
    %1508 = vmatprep.mubr.bf16.mxu0 0
    %1509 = vmatmul.mubr.bf16.gmra.mrb[0].mxu0 %v1404
    %v1510 = vpop.f32.mrb[0].mxu0
    %v1511 = vadd.f32 %v1426, %v1510
    %v1512 = vpop.f32.mrb[0].mxu0
    %v1513 = vpop.f32.mrb[0].mxu0
    %v1514 = vadd.f32 %v1426, %v1513
    %v1515 = vpop.f32.mrb[0].mxu0
    %1516 = vdwg.mxu0
    %1517 = vst [vmem:[#allocation8] sm:$0xff] %v1511
    %1518 = vst [vmem:[#allocation8 + $0x8] sm:$0xff] %v1514
    // Predicated region
    $region30: #{tpu_custom_call.1} parent=1 // pred_check
      _
    $region31: #{tpu_custom_call.1} parent=1 // pred_check_branch
      %1520 = sbr.rel (0) target = $region33
    $region32: #{tpu_custom_call.1} parent=1 // pred_region
      %s1522 = ssub.s32 256, 256
      %1523 = vsyncadd [#allocation4], %s1522
      %s1524 = sshll.u32 [#allocation8], 4
      %s1525 = int_to_ptr.vmem [resolvable:$true] %s1524
      %1530 = dma.vmem_to_hbm [thread:$0]  %s1525, 256, %s4, [#allocation4], 128, 128, 8
    $region33: #{tpu_custom_call.1} parent=1 // pred_fallthru
      _
    // Predicated region
    $region34: #{tpu_custom_call.1} parent=1 // pred_check
      _
    $region35: #{tpu_custom_call.1} parent=1 // pred_check_branch
      %1532 = sbr.rel (0) target = $region37
    $region36: #{tpu_custom_call.1} parent=1 // pred_region
      %1533 = dma.done [#allocation4], 256
    $region37: #{tpu_custom_call.1} parent=1 // pred_fallthru
      _
    %1534 = vsyncpa [#allocation3], 1
    %1535 = vsyncpa [#allocation6], 1
    %1536 = vsyncpa [#allocation4], 1

</llo_original>
